<compile_context>
chip_gen: v5e
topology: v5e:2x2
jax: 0.10.0
libtpu: 0.0.40
codegen_flags: <defaults>
</compile_context>

<pallas_src>
import functools

import jax
import jax.numpy as jnp
from jax.experimental import pallas as pl
from jax.experimental.pallas import tpu as pltpu


def _mha_kernel(*refs, num_heads, d_head, cross):
    # Refs (per grid step over batch):
    #   mask_ref: (1, S, S) 1 = keep / 0 = masked
    #   x refs:   (1, S, D)      wq/wk/wv/wo: (D, D) fused weights
    #   out_ref:  (1, S, D)      attn_ref:    (S, D) VMEM scratch (head concat)
    if cross:
        (mask_ref, x_kv_ref, x_q_ref, wq_ref, wk_ref, wv_ref, wo_ref,
         out_ref, attn_ref) = refs
    else:
        # Self-attention: a single activation input is DMA'd once and reused
        # for both the query and the key/value paths.
        (mask_ref, x_ref, wq_ref, wk_ref, wv_ref, wo_ref,
         out_ref, attn_ref) = refs
        x_kv_ref = x_q_ref = x_ref

    x_kv = x_kv_ref[0]                        # (S, D), native dtype
    x_q = x_q_ref[0]                          # (S, D)
    cdt = x_q.dtype                           # MXU operand dtype

    # Additive attention bias computed once per batch step and hoisted out of
    # the head loop: a single VPU compare+select on (S, S) replaces both the
    # per-head masked_fill and a wrapper-side bias materialization in HBM.
    bias = jnp.where(mask_ref[0] == 0, jnp.float32(-1e9), jnp.float32(0.0))

    # Fused projections: one full-width (S, D) @ (D, D) matmul per tensor.
    # The 1/sqrt(d_head) score scale is folded into wq in the wrapper.
    # Accumulate in f32, cast back so per-head matmuls run at the input dtype.
    q = jnp.dot(x_q, wq_ref[...], preferred_element_type=jnp.float32).astype(cdt)
    k = jnp.dot(x_kv, wk_ref[...], preferred_element_type=jnp.float32).astype(cdt)
    v = jnp.dot(x_kv, wv_ref[...], preferred_element_type=jnp.float32).astype(cdt)

    for h in range(num_heads):                # static unroll (small H)
        sl = slice(h * d_head, (h + 1) * d_head)
        q_h = q[:, sl]                        # (S, dh) lane slices of the
        k_h = k[:, sl]                        # fused projections
        v_h = v[:, sl]

        # q_h @ k_h^T: contract the last dim of both operands directly so the
        # "transpose" is handled by the MXU, not a materialized XLU transpose.
        scores = jax.lax.dot_general(
            q_h, k_h, (((1,), (1,)), ((), ())),
            preferred_element_type=jnp.float32) + bias

        # Numerically stable softmax; normalization is deferred to the
        # (S, d_head) context (cheaper than dividing the (S, S) probabilities)
        # and uses the EUP approximate reciprocal instead of a VPU divide.
        m = jnp.max(scores, axis=-1, keepdims=True)
        p = jnp.exp(scores - m)                          # unnormalized probs
        denom = jnp.sum(p, axis=-1, keepdims=True)       # (S, 1) f32

        ctx = jnp.dot(p.astype(cdt), v_h, preferred_element_type=jnp.float32)
        ctx = ctx * pl.reciprocal(denom, approx=True)

        # "Concatenate" heads by storing at lane offset h*d_head — no
        # jnp.concatenate / relayout of the full (S, D) activation.
        attn_ref[:, sl] = ctx.astype(attn_ref.dtype)

    # Output projection as one K = D matmul (better MXU utilization than H
    # K = d_head matmuls accumulated per head).
    out = jnp.dot(attn_ref[...], wo_ref[...],
                  preferred_element_type=jnp.float32)     # (S, D) f32
    out = out + x_q.astype(jnp.float32)                   # residual

    # torch.layer_norm(output, normalized_shape=output.size()[1:]):
    # normalize jointly over (S, D), no affine params, eps = 1e-5.
    mu = jnp.mean(out)
    var = jnp.mean((out - mu) * (out - mu))
    out_ref[0] = ((out - mu) * jax.lax.rsqrt(var + 1e-5)).astype(out_ref.dtype)


def _fuse_heads(w):
    """(H, D, dh) per-head weights -> (D, H*dh) fused projection matrix."""
    H, D, dh = w.shape
    return jnp.transpose(w, (1, 0, 2)).reshape(D, H * dh)


@jax.jit
def multi_head_attention(mask, x_key_value, wq, wk, wv, wo, x_query=None):
    """mask: (B,S,S) 1=keep/0=masked; x_*: (B,S,D); wq/wk/wv: (H,D,dh); wo: (D,D)."""
    cross = x_query is not None
    B, S, D = x_key_value.shape
    H, _, dh = wq.shape
    dtype = x_key_value.dtype
    itemsize = jnp.dtype(dtype).itemsize
    mask_itemsize = jnp.dtype(mask.dtype).itemsize

    # Fuse per-head projections into full (D, D) matrices and fold the
    # 1/sqrt(dh) score scale into wq (S*dh work instead of S*S per head).
    scale = 1.0 / float(dh) ** 0.5
    wq_f = (_fuse_heads(wq) * scale).astype(dtype)
    wk_f = _fuse_heads(wk).astype(dtype)
    wv_f = _fuse_heads(wv).astype(dtype)
    wo_f = wo.astype(dtype)

    in_specs = [
        pl.BlockSpec((1, S, S), lambda b: (b, 0, 0)),     # mask
        pl.BlockSpec((1, S, D), lambda b: (b, 0, 0)),     # x_key_value
    ]
    inputs = [mask, x_key_value]
    if cross:
        in_specs.append(pl.BlockSpec((1, S, D), lambda b: (b, 0, 0)))  # x_query
        inputs.append(x_query)
    # Grid-invariant weight blocks: the index map never changes, so the
    # pipeline does not re-DMA them per batch step.
    w_spec = pl.BlockSpec((D, D), lambda b: (0, 0))
    in_specs += [w_spec] * 4
    inputs += [wq_f, wk_f, wv_f, wo_f]

    # Rough per-step VMEM footprint so the scoped limit is raised explicitly on
    # v5e/v6e (16/32 MiB defaults) while staying under v7x's 64 MiB physical.
    est = int(
        2 * S * S * mask_itemsize                    # mask (double buffered)
        + (4 if cross else 2) * S * D * itemsize     # activations
        + 8 * D * D * itemsize                       # 4 weight blocks
        + 3 * S * D * itemsize                       # out block + attn scratch
        + 3 * S * D * 4                              # q, k, v f32 values
        + 5 * S * S * 4)                             # bias / scores / exp temps
    vmem_limit = int(min(max(est * 5 // 4, 32 * 2 ** 20), 60 * 2 ** 20))

    grid_spec = pltpu.PrefetchScalarGridSpec(
        num_scalar_prefetch=0,
        grid=(B,),
        in_specs=in_specs,
        out_specs=pl.BlockSpec((1, S, D), lambda b: (b, 0, 0)),
        scratch_shapes=[pltpu.VMEM((S, D), dtype)],
    )
    kernel = functools.partial(_mha_kernel, num_heads=H, d_head=dh, cross=cross)
    return pl.pallas_call(
        kernel,
        out_shape=jax.ShapeDtypeStruct((B, S, D), dtype),
        grid_spec=grid_spec,
        compiler_params=pltpu.CompilerParams(
            dimension_semantics=("parallel",),
            vmem_limit_bytes=vmem_limit),
    )(*inputs)


if __name__ == "__main__":
    # Small but TPU-friendly shapes: seq and d_model are multiples of 128 so
    # the kernel exercises full vregs and lane-dense (unmasked) output stores.
    B, S, D, H = 2, 128, 128, 4
    dh = D // H

    key = jax.random.PRNGKey(0)
    kx, kxq, kq, kk, kv, ko = jax.random.split(key, 6)

    x = jax.random.normal(kx, (B, S, D), dtype=jnp.float32)
    x_q = jax.random.normal(kxq, (B, S, D), dtype=jnp.float32)

    # Deterministic synthetic parameters (the module's __init__ zero-inits wo,
    # which makes the output degenerate, so use small random values instead).
    wq = 0.1 * jax.random.normal(kq, (H, D, dh), dtype=jnp.float32)
    wk = 0.1 * jax.random.normal(kk, (H, D, dh), dtype=jnp.float32)
    wv = 0.1 * jax.random.normal(kv, (H, D, dh), dtype=jnp.float32)
    wo = 0.1 * jax.random.normal(ko, (D, D), dtype=jnp.float32)

    # Causal mask (1 = attend, 0 = masked), broadcast to batch.
    causal = jnp.tril(jnp.ones((S, S), dtype=jnp.float32))
    mask = jnp.broadcast_to(causal, (B, S, S))

    # Pure-JAX reference (same math, outside Pallas).
    def ref(mask, x_kv, x_q, wq, wk, wv, wo):
        q = jnp.einsum("bsd,hde->bhse", x_q, wq)
        k = jnp.einsum("bsd,hde->bhse", x_kv, wk)
        v = jnp.einsum("bsd,hde->bhse", x_kv, wv)
        s = jnp.einsum("bhqe,bhke->bhqk", q, k) / jnp.sqrt(jnp.float32(dh))
        s = jnp.where(mask[:, None] == 0, -1e9, s)
        p = jax.nn.softmax(s, axis=-1)
        ctx = jnp.einsum("bhqk,bhke->bhqe", p, v)
        ctx = jnp.transpose(ctx, (0, 2, 1, 3)).reshape(B, S, D)
        o = ctx @ wo + x_q
        mu = jnp.mean(o, axis=(1, 2), keepdims=True)
        var = jnp.mean((o - mu) ** 2, axis=(1, 2), keepdims=True)
        return (o - mu) * jax.lax.rsqrt(var + 1e-5)

    # Self-attention path (x_query=None -> query / key / value share one DMA).
    out_self = multi_head_attention(mask, x, wq, wk, wv, wo)
    jax.block_until_ready(out_self)
    err_self = float(jnp.max(jnp.abs(out_self - ref(mask, x, x, wq, wk, wv, wo))))

    # Cross-attention path (separate x_query input, residual uses x_query).
    out_cross = multi_head_attention(mask, x, wq, wk, wv, wo, x_query=x_q)
    jax.block_until_ready(out_cross)
    err_cross = float(jnp.max(jnp.abs(out_cross - ref(mask, x, x_q, wq, wk, wv, wo))))

    # Tolerance covers the EUP approximate-reciprocal softmax normalization.
    assert err_self < 2e-2, err_self
    assert err_cross < 2e-2, err_cross

    print("KERNEL_OK")
</pallas_src>

<mosaic_0001>
module attributes {stable_mosaic.version = 11 : i64} {
  func.func @_mha_kernel(%arg0: i32, %arg1: memref<1x128x128xf32, #tpu.memory_space<vmem>>, %arg2: memref<1x128x128xf32, #tpu.memory_space<vmem>>, %arg3: memref<128x128xf32, #tpu.memory_space<vmem>>, %arg4: memref<128x128xf32, #tpu.memory_space<vmem>>, %arg5: memref<128x128xf32, #tpu.memory_space<vmem>>, %arg6: memref<128x128xf32, #tpu.memory_space<vmem>>, %arg7: memref<1x128x128xf32, #tpu.memory_space<vmem>>, %arg8: memref<128x128xf32, #tpu.memory_space<vmem>>) attributes {dimension_semantics = [#tpu.dimension_semantics<parallel>], iteration_bounds = array<i64: 2>, scalar_prefetch = 0 : i64, scratch_operands = 1 : i64, tpu.core_type = #tpu.core_type<tc>, window_params = [{transform_indices = @transform_0, window_bounds = array<i64: 1, 128, 128>}, {transform_indices = @transform_1, window_bounds = array<i64: 1, 128, 128>}, {pipeline_mode = #tpu.pipeline_mode<synchronous>, transform_indices = @transform_2, window_bounds = array<i64: 128, 128>}, {pipeline_mode = #tpu.pipeline_mode<synchronous>, transform_indices = @transform_3, window_bounds = array<i64: 128, 128>}, {pipeline_mode = #tpu.pipeline_mode<synchronous>, transform_indices = @transform_4, window_bounds = array<i64: 128, 128>}, {pipeline_mode = #tpu.pipeline_mode<synchronous>, transform_indices = @transform_5, window_bounds = array<i64: 128, 128>}, {transform_indices = @transform_6, window_bounds = array<i64: 1, 128, 128>}]} {
    %c0 = arith.constant 0 : index
    %c0_0 = arith.constant 0 : index
    %c0_1 = arith.constant 0 : index
    %0 = vector.load %arg2[%c0, %c0_0, %c0_1] : memref<1x128x128xf32, #tpu.memory_space<vmem>>, vector<1x128x128xf32>
    %1 = vector.shape_cast %0 : vector<1x128x128xf32> to vector<128x128xf32>
    %c0_2 = arith.constant 0 : index
    %c0_3 = arith.constant 0 : index
    %c0_4 = arith.constant 0 : index
    %2 = vector.load %arg2[%c0_2, %c0_3, %c0_4] : memref<1x128x128xf32, #tpu.memory_space<vmem>>, vector<1x128x128xf32>
    %3 = vector.shape_cast %2 : vector<1x128x128xf32> to vector<128x128xf32>
    %c0_5 = arith.constant 0 : index
    %c0_6 = arith.constant 0 : index
    %c0_7 = arith.constant 0 : index
    %4 = vector.load %arg1[%c0_5, %c0_6, %c0_7] : memref<1x128x128xf32, #tpu.memory_space<vmem>>, vector<1x128x128xf32>
    %5 = vector.shape_cast %4 : vector<1x128x128xf32> to vector<128x128xf32>
    %cst = arith.constant 0.000000e+00 : f32
    %6 = vector.broadcast %cst : f32 to vector<128x128xf32>
    %7 = arith.cmpf oeq, %5, %6 : vector<128x128xf32>
    %cst_8 = arith.constant -1.000000e+09 : f32
    %cst_9 = arith.constant 0.000000e+00 : f32
    %8 = vector.broadcast %cst_8 : f32 to vector<128x128xf32>
    %9 = vector.broadcast %cst_9 : f32 to vector<128x128xf32>
    %10 = arith.select %7, %8, %9 : vector<128x128xi1>, vector<128x128xf32>
    %c0_10 = arith.constant 0 : index
    %c0_11 = arith.constant 0 : index
    %11 = vector.load %arg3[%c0_10, %c0_11] : memref<128x128xf32, #tpu.memory_space<vmem>>, vector<128x128xf32>
    %cst_12 = arith.constant dense<0.000000e+00> : vector<128x128xf32>
    %12 = tpu.matmul %3, %11, %cst_12 {dimension_numbers = #tpu.dot_dimension_numbers<[1], [0], [0], [1], [0, 0, 1, 1], [], []>} : vector<128x128xf32>, vector<128x128xf32>, vector<128x128xf32> -> vector<128x128xf32>
    %c0_13 = arith.constant 0 : index
    %c0_14 = arith.constant 0 : index
    %13 = vector.load %arg4[%c0_13, %c0_14] : memref<128x128xf32, #tpu.memory_space<vmem>>, vector<128x128xf32>
    %cst_15 = arith.constant dense<0.000000e+00> : vector<128x128xf32>
    %14 = tpu.matmul %1, %13, %cst_15 {dimension_numbers = #tpu.dot_dimension_numbers<[1], [0], [0], [1], [0, 0, 1, 1], [], []>} : vector<128x128xf32>, vector<128x128xf32>, vector<128x128xf32> -> vector<128x128xf32>
    %c0_16 = arith.constant 0 : index
    %c0_17 = arith.constant 0 : index
    %15 = vector.load %arg5[%c0_16, %c0_17] : memref<128x128xf32, #tpu.memory_space<vmem>>, vector<128x128xf32>
    %cst_18 = arith.constant dense<0.000000e+00> : vector<128x128xf32>
    %16 = tpu.matmul %1, %15, %cst_18 {dimension_numbers = #tpu.dot_dimension_numbers<[1], [0], [0], [1], [0, 0, 1, 1], [], []>} : vector<128x128xf32>, vector<128x128xf32>, vector<128x128xf32> -> vector<128x128xf32>
    %17 = vector.extract_strided_slice %12 {offsets = [0, 0], sizes = [128, 32], strides = [1, 1]} : vector<128x128xf32> to vector<128x32xf32>
    %18 = vector.extract_strided_slice %14 {offsets = [0, 0], sizes = [128, 32], strides = [1, 1]} : vector<128x128xf32> to vector<128x32xf32>
    %19 = vector.extract_strided_slice %16 {offsets = [0, 0], sizes = [128, 32], strides = [1, 1]} : vector<128x128xf32> to vector<128x32xf32>
    %cst_19 = arith.constant dense<0.000000e+00> : vector<128x128xf32>
    %20 = tpu.matmul %17, %18, %cst_19 {dimension_numbers = #tpu.dot_dimension_numbers<[1], [1], [0], [0], [0, 0, 1, 0], [], []>} : vector<128x32xf32>, vector<128x32xf32>, vector<128x128xf32> -> vector<128x128xf32>
    %21 = arith.addf %20, %10 : vector<128x128xf32>
    %cst_20 = arith.constant dense<0xFF800000> : vector<128xf32>
    %22 = vector.multi_reduction <maximumf>, %21, %cst_20 [1] : vector<128x128xf32> to vector<128xf32>
    %23 = vector.shape_cast %22 : vector<128xf32> to vector<128x1xf32>
    %24 = vector.broadcast %23 : vector<128x1xf32> to vector<128x128xf32>
    %25 = arith.subf %21, %24 : vector<128x128xf32>
    %26 = math.exp %25 : vector<128x128xf32>
    %cst_21 = arith.constant dense<0.000000e+00> : vector<128xf32>
    %27 = vector.multi_reduction <add>, %26, %cst_21 [1] : vector<128x128xf32> to vector<128xf32>
    %28 = vector.shape_cast %27 : vector<128xf32> to vector<128x1xf32>
    %cst_22 = arith.constant dense<0.000000e+00> : vector<128x32xf32>
    %29 = tpu.matmul %26, %19, %cst_22 {dimension_numbers = #tpu.dot_dimension_numbers<[1], [0], [0], [1], [0, 0, 1, 1], [], []>} : vector<128x128xf32>, vector<128x32xf32>, vector<128x32xf32> -> vector<128x32xf32>
    %30 = tpu.reciprocal %28 {approx = true} : vector<128x1xf32> -> vector<128x1xf32>
    %31 = vector.broadcast %30 : vector<128x1xf32> to vector<128x32xf32>
    %32 = arith.mulf %29, %31 : vector<128x32xf32>
    %c0_23 = arith.constant 0 : index
    %c0_24 = arith.constant 0 : index
    %33 = vector.load %arg8[%c0_23, %c0_24] : memref<128x128xf32, #tpu.memory_space<vmem>>, vector<128x32xf32>
    tpu.vector_store %arg8[%c0_23, %c0_24], %32 {strides = array<i32>} : memref<128x128xf32, #tpu.memory_space<vmem>>, vector<128x32xf32>,
    %34 = vector.extract_strided_slice %12 {offsets = [0, 32], sizes = [128, 32], strides = [1, 1]} : vector<128x128xf32> to vector<128x32xf32>
    %35 = vector.extract_strided_slice %14 {offsets = [0, 32], sizes = [128, 32], strides = [1, 1]} : vector<128x128xf32> to vector<128x32xf32>
    %36 = vector.extract_strided_slice %16 {offsets = [0, 32], sizes = [128, 32], strides = [1, 1]} : vector<128x128xf32> to vector<128x32xf32>
    %cst_25 = arith.constant dense<0.000000e+00> : vector<128x128xf32>
    %37 = tpu.matmul %34, %35, %cst_25 {dimension_numbers = #tpu.dot_dimension_numbers<[1], [1], [0], [0], [0, 0, 1, 0], [], []>} : vector<128x32xf32>, vector<128x32xf32>, vector<128x128xf32> -> vector<128x128xf32>
    %38 = arith.addf %37, %10 : vector<128x128xf32>
    %cst_26 = arith.constant dense<0xFF800000> : vector<128xf32>
    %39 = vector.multi_reduction <maximumf>, %38, %cst_26 [1] : vector<128x128xf32> to vector<128xf32>
    %40 = vector.shape_cast %39 : vector<128xf32> to vector<128x1xf32>
    %41 = vector.broadcast %40 : vector<128x1xf32> to vector<128x128xf32>
    %42 = arith.subf %38, %41 : vector<128x128xf32>
    %43 = math.exp %42 : vector<128x128xf32>
    %cst_27 = arith.constant dense<0.000000e+00> : vector<128xf32>
    %44 = vector.multi_reduction <add>, %43, %cst_27 [1] : vector<128x128xf32> to vector<128xf32>
    %45 = vector.shape_cast %44 : vector<128xf32> to vector<128x1xf32>
    %cst_28 = arith.constant dense<0.000000e+00> : vector<128x32xf32>
    %46 = tpu.matmul %43, %36, %cst_28 {dimension_numbers = #tpu.dot_dimension_numbers<[1], [0], [0], [1], [0, 0, 1, 1], [], []>} : vector<128x128xf32>, vector<128x32xf32>, vector<128x32xf32> -> vector<128x32xf32>
    %47 = tpu.reciprocal %45 {approx = true} : vector<128x1xf32> -> vector<128x1xf32>
    %48 = vector.broadcast %47 : vector<128x1xf32> to vector<128x32xf32>
    %49 = arith.mulf %46, %48 : vector<128x32xf32>
    %c0_29 = arith.constant 0 : index
    %c32 = arith.constant 32 : index
    %50 = vector.load %arg8[%c0_29, %c32] : memref<128x128xf32, #tpu.memory_space<vmem>>, vector<128x32xf32>
    tpu.vector_store %arg8[%c0_29, %c32], %49 {strides = array<i32>} : memref<128x128xf32, #tpu.memory_space<vmem>>, vector<128x32xf32>,
    %51 = vector.extract_strided_slice %12 {offsets = [0, 64], sizes = [128, 32], strides = [1, 1]} : vector<128x128xf32> to vector<128x32xf32>
    %52 = vector.extract_strided_slice %14 {offsets = [0, 64], sizes = [128, 32], strides = [1, 1]} : vector<128x128xf32> to vector<128x32xf32>
    %53 = vector.extract_strided_slice %16 {offsets = [0, 64], sizes = [128, 32], strides = [1, 1]} : vector<128x128xf32> to vector<128x32xf32>
    %cst_30 = arith.constant dense<0.000000e+00> : vector<128x128xf32>
    %54 = tpu.matmul %51, %52, %cst_30 {dimension_numbers = #tpu.dot_dimension_numbers<[1], [1], [0], [0], [0, 0, 1, 0], [], []>} : vector<128x32xf32>, vector<128x32xf32>, vector<128x128xf32> -> vector<128x128xf32>
    %55 = arith.addf %54, %10 : vector<128x128xf32>
    %cst_31 = arith.constant dense<0xFF800000> : vector<128xf32>
    %56 = vector.multi_reduction <maximumf>, %55, %cst_31 [1] : vector<128x128xf32> to vector<128xf32>
    %57 = vector.shape_cast %56 : vector<128xf32> to vector<128x1xf32>
    %58 = vector.broadcast %57 : vector<128x1xf32> to vector<128x128xf32>
    %59 = arith.subf %55, %58 : vector<128x128xf32>
    %60 = math.exp %59 : vector<128x128xf32>
    %cst_32 = arith.constant dense<0.000000e+00> : vector<128xf32>
    %61 = vector.multi_reduction <add>, %60, %cst_32 [1] : vector<128x128xf32> to vector<128xf32>
    %62 = vector.shape_cast %61 : vector<128xf32> to vector<128x1xf32>
    %cst_33 = arith.constant dense<0.000000e+00> : vector<128x32xf32>
    %63 = tpu.matmul %60, %53, %cst_33 {dimension_numbers = #tpu.dot_dimension_numbers<[1], [0], [0], [1], [0, 0, 1, 1], [], []>} : vector<128x128xf32>, vector<128x32xf32>, vector<128x32xf32> -> vector<128x32xf32>
    %64 = tpu.reciprocal %62 {approx = true} : vector<128x1xf32> -> vector<128x1xf32>
    %65 = vector.broadcast %64 : vector<128x1xf32> to vector<128x32xf32>
    %66 = arith.mulf %63, %65 : vector<128x32xf32>
    %c0_34 = arith.constant 0 : index
    %c64 = arith.constant 64 : index
    %67 = vector.load %arg8[%c0_34, %c64] : memref<128x128xf32, #tpu.memory_space<vmem>>, vector<128x32xf32>
    tpu.vector_store %arg8[%c0_34, %c64], %66 {strides = array<i32>} : memref<128x128xf32, #tpu.memory_space<vmem>>, vector<128x32xf32>,
    %68 = vector.extract_strided_slice %12 {offsets = [0, 96], sizes = [128, 32], strides = [1, 1]} : vector<128x128xf32> to vector<128x32xf32>
    %69 = vector.extract_strided_slice %14 {offsets = [0, 96], sizes = [128, 32], strides = [1, 1]} : vector<128x128xf32> to vector<128x32xf32>
    %70 = vector.extract_strided_slice %16 {offsets = [0, 96], sizes = [128, 32], strides = [1, 1]} : vector<128x128xf32> to vector<128x32xf32>
    %cst_35 = arith.constant dense<0.000000e+00> : vector<128x128xf32>
    %71 = tpu.matmul %68, %69, %cst_35 {dimension_numbers = #tpu.dot_dimension_numbers<[1], [1], [0], [0], [0, 0, 1, 0], [], []>} : vector<128x32xf32>, vector<128x32xf32>, vector<128x128xf32> -> vector<128x128xf32>
    %72 = arith.addf %71, %10 : vector<128x128xf32>
    %cst_36 = arith.constant dense<0xFF800000> : vector<128xf32>
    %73 = vector.multi_reduction <maximumf>, %72, %cst_36 [1] : vector<128x128xf32> to vector<128xf32>
    %74 = vector.shape_cast %73 : vector<128xf32> to vector<128x1xf32>
    %75 = vector.broadcast %74 : vector<128x1xf32> to vector<128x128xf32>
    %76 = arith.subf %72, %75 : vector<128x128xf32>
    %77 = math.exp %76 : vector<128x128xf32>
    %cst_37 = arith.constant dense<0.000000e+00> : vector<128xf32>
    %78 = vector.multi_reduction <add>, %77, %cst_37 [1] : vector<128x128xf32> to vector<128xf32>
    %79 = vector.shape_cast %78 : vector<128xf32> to vector<128x1xf32>
    %cst_38 = arith.constant dense<0.000000e+00> : vector<128x32xf32>
    %80 = tpu.matmul %77, %70, %cst_38 {dimension_numbers = #tpu.dot_dimension_numbers<[1], [0], [0], [1], [0, 0, 1, 1], [], []>} : vector<128x128xf32>, vector<128x32xf32>, vector<128x32xf32> -> vector<128x32xf32>
    %81 = tpu.reciprocal %79 {approx = true} : vector<128x1xf32> -> vector<128x1xf32>
    %82 = vector.broadcast %81 : vector<128x1xf32> to vector<128x32xf32>
    %83 = arith.mulf %80, %82 : vector<128x32xf32>
    %c0_39 = arith.constant 0 : index
    %c96 = arith.constant 96 : index
    %84 = vector.load %arg8[%c0_39, %c96] : memref<128x128xf32, #tpu.memory_space<vmem>>, vector<128x32xf32>
    tpu.vector_store %arg8[%c0_39, %c96], %83 {strides = array<i32>} : memref<128x128xf32, #tpu.memory_space<vmem>>, vector<128x32xf32>,
    %c0_40 = arith.constant 0 : index
    %c0_41 = arith.constant 0 : index
    %85 = vector.load %arg8[%c0_40, %c0_41] : memref<128x128xf32, #tpu.memory_space<vmem>>, vector<128x128xf32>
    %c0_42 = arith.constant 0 : index
    %c0_43 = arith.constant 0 : index
    %86 = vector.load %arg6[%c0_42, %c0_43] : memref<128x128xf32, #tpu.memory_space<vmem>>, vector<128x128xf32>
    %cst_44 = arith.constant dense<0.000000e+00> : vector<128x128xf32>
    %87 = tpu.matmul %85, %86, %cst_44 {dimension_numbers = #tpu.dot_dimension_numbers<[1], [0], [0], [1], [0, 0, 1, 1], [], []>} : vector<128x128xf32>, vector<128x128xf32>, vector<128x128xf32> -> vector<128x128xf32>
    %88 = arith.addf %87, %3 : vector<128x128xf32>
    %89 = vector.shape_cast %88 : vector<128x128xf32> to vector<1x128x128xf32>
    %cst_45 = arith.constant dense<0.000000e+00> : vector<1xf32>
    %90 = vector.multi_reduction <add>, %89, %cst_45 [1, 2] : vector<1x128x128xf32> to vector<1xf32>
    %91 = vector.shape_cast %90 : vector<1xf32> to vector<1x1x1xf32>
    %92 = vector.extract %91[0, 0, 0] : f32 from vector<1x1x1xf32>
    %cst_46 = arith.constant 1.638400e+04 : f32
    %93 = arith.divf %92, %cst_46 : f32
    %94 = vector.broadcast %93 : f32 to vector<128x128xf32>
    %95 = arith.subf %88, %94 : vector<128x128xf32>
    %96 = vector.broadcast %93 : f32 to vector<128x128xf32>
    %97 = arith.subf %88, %96 : vector<128x128xf32>
    %98 = arith.mulf %95, %97 : vector<128x128xf32>
    %99 = vector.shape_cast %98 : vector<128x128xf32> to vector<1x128x128xf32>
    %cst_47 = arith.constant dense<0.000000e+00> : vector<1xf32>
    %100 = vector.multi_reduction <add>, %99, %cst_47 [1, 2] : vector<1x128x128xf32> to vector<1xf32>
    %101 = vector.shape_cast %100 : vector<1xf32> to vector<1x1x1xf32>
    %102 = vector.extract %101[0, 0, 0] : f32 from vector<1x1x1xf32>
    %cst_48 = arith.constant 1.638400e+04 : f32
    %103 = arith.divf %102, %cst_48 : f32
    %104 = vector.broadcast %93 : f32 to vector<128x128xf32>
    %105 = arith.subf %88, %104 : vector<128x128xf32>
    %cst_49 = arith.constant 9.99999974E-6 : f32
    %106 = arith.addf %103, %cst_49 : f32
    %107 = math.rsqrt %106 : f32
    %108 = vector.broadcast %107 : f32 to vector<128x128xf32>
    %109 = arith.mulf %105, %108 : vector<128x128xf32>
    %c0_50 = arith.constant 0 : index
    %c0_51 = arith.constant 0 : index
    %c0_52 = arith.constant 0 : index
    %110 = vector.load %arg7[%c0_50, %c0_51, %c0_52] : memref<1x128x128xf32, #tpu.memory_space<vmem>>, vector<1x128x128xf32>
    %111 = vector.shape_cast %110 : vector<1x128x128xf32> to vector<128x128xf32>
    %112 = vector.shape_cast %109 : vector<128x128xf32> to vector<1x128x128xf32>
    tpu.vector_store %arg7[%c0_50, %c0_51, %c0_52], %112 {strides = array<i32>} : memref<1x128x128xf32, #tpu.memory_space<vmem>>, vector<1x128x128xf32>,
    return
  }
  func.func @transform_0(%arg0: i32) -> (i32, i32, i32) {
    %c0_i32 = arith.constant 0 : i32
    %c0_i32_0 = arith.constant 0 : i32
    %c0_i32_1 = arith.constant 0 : i32
    return %arg0, %c0_i32, %c0_i32_0 : i32, i32, i32
  }
  func.func @transform_1(%arg0: i32) -> (i32, i32, i32) {
    %c0_i32 = arith.constant 0 : i32
    %c0_i32_0 = arith.constant 0 : i32
    %c0_i32_1 = arith.constant 0 : i32
    return %arg0, %c0_i32, %c0_i32_0 : i32, i32, i32
  }
  func.func @transform_2(%arg0: i32) -> (i32, i32) {
    %c0_i32 = arith.constant 0 : i32
    %c0_i32_0 = arith.constant 0 : i32
    %c0_i32_1 = arith.constant 0 : i32
    return %c0_i32, %c0_i32_0 : i32, i32
  }
  func.func @transform_3(%arg0: i32) -> (i32, i32) {
    %c0_i32 = arith.constant 0 : i32
    %c0_i32_0 = arith.constant 0 : i32
    %c0_i32_1 = arith.constant 0 : i32
    return %c0_i32, %c0_i32_0 : i32, i32
  }
  func.func @transform_4(%arg0: i32) -> (i32, i32) {
    %c0_i32 = arith.constant 0 : i32
    %c0_i32_0 = arith.constant 0 : i32
    %c0_i32_1 = arith.constant 0 : i32
    return %c0_i32, %c0_i32_0 : i32, i32
  }
  func.func @transform_5(%arg0: i32) -> (i32, i32) {
    %c0_i32 = arith.constant 0 : i32
    %c0_i32_0 = arith.constant 0 : i32
    %c0_i32_1 = arith.constant 0 : i32
    return %c0_i32, %c0_i32_0 : i32, i32
  }
  func.func @transform_6(%arg0: i32) -> (i32, i32, i32) {
    %c0_i32 = arith.constant 0 : i32
    %c0_i32_0 = arith.constant 0 : i32
    %c0_i32_1 = arith.constant 0 : i32
    return %arg0, %c0_i32, %c0_i32_0 : i32, i32, i32
  }
}

</mosaic_0001>

<llo_original>
// kernel: multi_head_attention.1
$region0: #{multi_head_attention.1}
  #allocation0 [shape = 'u32[]', space=smem, size = 0x4, offset = 0x4, fixed_abs, tag = 'smem constant byte address 0x4 - core index']
  #allocation1 [shape = 'u32[72,128]{1,0:T(1,128)}', space=vmem, size = 0x9000, scoped, tag = 'internal scratch']
  #allocation2 [shape = 'f32[128,128]{1,0:T(8,128)}', space=vmem, size = 0x10000, scoped, tag = 'scratch operand']
  %s0 = inlined_call_operand.vmem [shape: f32[2,128,128], index: 0, kind: input, shape index: {}]
  %s1 = inlined_call_operand.vmem [shape: f32[2,128,128], index: 1, kind: input, shape index: {}]
  %s2 = inlined_call_operand.vmem [shape: f32[128,128], index: 2, kind: input, shape index: {}]
  %s3 = inlined_call_operand.vmem [shape: f32[128,128], index: 3, kind: input, shape index: {}]
  %s4 = inlined_call_operand.vmem [shape: f32[128,128], index: 4, kind: input, shape index: {}]
  %s5 = inlined_call_operand.vmem [shape: f32[128,128], index: 5, kind: input, shape index: {}]
  %s6 = inlined_call_operand.hbm [shape: f32[2,128,128], index: 6, kind: output, shape index: {}]
  %s7 = sld [smem:[#allocation0]]
  $region57: #{multi_head_attention.1} parent=0
    _
  %s9 = ssub.s32 1, %s7
  %s10 = scalar_select 0, %s9, %s7
  $region1: #{multi_head_attention.1} parent=0
    #allocation3 [shape = 'u8[131072]{0}', space=vmem, size = 0x20000, scoped, tag = 'output window, operand 0']
    #allocation4 [shape = 's32[2]{0}', space=sflag, size = 0x8, scoped, tag = 'scoped memory for multi_head_attention.1']
    %11 = vsyncpa [#allocation4], 0
    %s12 = scalar_lea.sflag [#allocation4], 1
    %13 = vsyncpa %s12, 0
    loop: start=0, step=1, limit=4
    $region2: #{multi_head_attention.1} parent=1 // loop_pre_header
      _
    $region3: #{multi_head_attention.1} parent=1 // loop_header
      %s15 = sphi 0, %s19
      %p16 = scmp.ge.s32.totalorder %s15, 4
      %s25 = sphi 0, %s27
      %s28 = sphi 0, %s25
      %s29 = sphi 0, %s28
      %s45 = sphi 0, %s29
      %s51 = sphi 0, %s53
      %s54 = sphi 0, %s51
      %s55 = sphi 0, %s54
      %s71 = sphi 0, %s55
      %s75 = sphi 0, %s75
      %s77 = sphi 0, %s75
      %s78 = sphi 0, %s77
      %s92 = sphi 0, %s78
      %s96 = sphi 0, %s96
      %s98 = sphi 0, %s96
      %s99 = sphi 0, %s98
      %s113 = sphi 0, %s99
      %s117 = sphi 0, %s117
      %s119 = sphi 0, %s117
      %s120 = sphi 0, %s119
      %s134 = sphi 0, %s120
      %s138 = sphi 0, %s138
      %s140 = sphi 0, %s138
      %s141 = sphi 0, %s140
      %s155 = sphi 0, %s141
      %s161 = sphi 0, %s163
      %s164 = sphi 0, %s161
      %s165 = sphi 0, %s164
      %s181 = sphi 0, %s165
    $region4: #{multi_head_attention.1} parent=1 // loop_header_branch
      %18 = sbr.rel (%p16) target = $region8
    $region5: #{multi_head_attention.1} parent=1 // loop_body
      %s20 = ssub.s32 %s15, 1
      %s21 = ssub.s32 %s15, 2
      %s22 = sadd.s32 %s15, 1
      %s23 = ssub.s32 %s15, %s22
      %p24 = scmp.eq.s32.totalorder %s23, 0
      %s26 = sadd.s32 %s25, 1
      %s27 = scalar_select %p24, %s25, %s26
      %p30 = pneg %p24
      %p31 = scmp.eq.s32.totalorder %s15, 1
      %p32 = por %p30, %p31
      %p33 = scmp.ne.s32.totalorder %s25, %s28
      %p34 = scmp.eq.s32.totalorder %s15, 0
      %p35 = por %p33, %p34
      %p36 = scmp.ne.s32.totalorder %s25, %s28
      %p37 = scmp.eq.s32.totalorder %s20, 1
      %p38 = por %p36, %p37
      %p39 = scmp.ne.s32.totalorder %s28, %s29
      %p40 = scmp.eq.s32.totalorder %s20, 0
      %p41 = por %p39, %p40
      %p42 = scmp.ne.s32.totalorder %s28, %s29
      %p43 = scmp.eq.s32.totalorder %s21, 1
      %p44 = por %p42, %p43
      %p46 = scmp.ne.s32.totalorder %s29, %s45
      %p47 = scmp.eq.s32.totalorder %s21, 0
      %p48 = por %p46, %p47
      %s49 = ssub.s32 %s15, %s22
      %p50 = scmp.eq.s32.totalorder %s49, 0
      %s52 = sadd.s32 %s51, 1
      %s53 = scalar_select %p50, %s51, %s52
      %p56 = pneg %p50
      %p57 = scmp.eq.s32.totalorder %s15, 1
      %p58 = por %p56, %p57
      %p59 = scmp.ne.s32.totalorder %s51, %s54
      %p60 = scmp.eq.s32.totalorder %s15, 0
      %p61 = por %p59, %p60
      %p62 = scmp.ne.s32.totalorder %s51, %s54
      %p63 = scmp.eq.s32.totalorder %s20, 1
      %p64 = por %p62, %p63
      %p65 = scmp.ne.s32.totalorder %s54, %s55
      %p66 = scmp.eq.s32.totalorder %s20, 0
      %p67 = por %p65, %p66
      %p68 = scmp.ne.s32.totalorder %s54, %s55
      %p69 = scmp.eq.s32.totalorder %s21, 1
      %p70 = por %p68, %p69
      %p72 = scmp.ne.s32.totalorder %s55, %s71
      %p73 = scmp.eq.s32.totalorder %s21, 0
      %p74 = por %p72, %p73
      %s76 = sadd.s32 %s75, 1
      %p79 = scmp.eq.s32.totalorder %s15, 1
      %p80 = scmp.ne.s32.totalorder %s75, %s77
      %p81 = scmp.eq.s32.totalorder %s15, 0
      %p82 = por %p80, %p81
      %p83 = scmp.ne.s32.totalorder %s75, %s77
      %p84 = scmp.eq.s32.totalorder %s20, 1
      %p85 = por %p83, %p84
      %p86 = scmp.ne.s32.totalorder %s77, %s78
      %p87 = scmp.eq.s32.totalorder %s20, 0
      %p88 = por %p86, %p87
      %p89 = scmp.ne.s32.totalorder %s77, %s78
      %p90 = scmp.eq.s32.totalorder %s21, 1
      %p91 = por %p89, %p90
      %p93 = scmp.ne.s32.totalorder %s78, %s92
      %p94 = scmp.eq.s32.totalorder %s21, 0
      %p95 = por %p93, %p94
      %s97 = sadd.s32 %s96, 1
      %p100 = scmp.eq.s32.totalorder %s15, 1
      %p101 = scmp.ne.s32.totalorder %s96, %s98
      %p102 = scmp.eq.s32.totalorder %s15, 0
      %p103 = por %p101, %p102
      %p104 = scmp.ne.s32.totalorder %s96, %s98
      %p105 = scmp.eq.s32.totalorder %s20, 1
      %p106 = por %p104, %p105
      %p107 = scmp.ne.s32.totalorder %s98, %s99
      %p108 = scmp.eq.s32.totalorder %s20, 0
      %p109 = por %p107, %p108
      %p110 = scmp.ne.s32.totalorder %s98, %s99
      %p111 = scmp.eq.s32.totalorder %s21, 1
      %p112 = por %p110, %p111
      %p114 = scmp.ne.s32.totalorder %s99, %s113
      %p115 = scmp.eq.s32.totalorder %s21, 0
      %p116 = por %p114, %p115
      %s118 = sadd.s32 %s117, 1
      %p121 = scmp.eq.s32.totalorder %s15, 1
      %p122 = scmp.ne.s32.totalorder %s117, %s119
      %p123 = scmp.eq.s32.totalorder %s15, 0
      %p124 = por %p122, %p123
      %p125 = scmp.ne.s32.totalorder %s117, %s119
      %p126 = scmp.eq.s32.totalorder %s20, 1
      %p127 = por %p125, %p126
      %p128 = scmp.ne.s32.totalorder %s119, %s120
      %p129 = scmp.eq.s32.totalorder %s20, 0
      %p130 = por %p128, %p129
      %p131 = scmp.ne.s32.totalorder %s119, %s120
      %p132 = scmp.eq.s32.totalorder %s21, 1
      %p133 = por %p131, %p132
      %p135 = scmp.ne.s32.totalorder %s120, %s134
      %p136 = scmp.eq.s32.totalorder %s21, 0
      %p137 = por %p135, %p136
      %s139 = sadd.s32 %s138, 1
      %p142 = scmp.eq.s32.totalorder %s15, 1
      %p143 = scmp.ne.s32.totalorder %s138, %s140
      %p144 = scmp.eq.s32.totalorder %s15, 0
      %p145 = por %p143, %p144
      %p146 = scmp.ne.s32.totalorder %s138, %s140
      %p147 = scmp.eq.s32.totalorder %s20, 1
      %p148 = por %p146, %p147
      %p149 = scmp.ne.s32.totalorder %s140, %s141
      %p150 = scmp.eq.s32.totalorder %s20, 0
      %p151 = por %p149, %p150
      %p152 = scmp.ne.s32.totalorder %s140, %s141
      %p153 = scmp.eq.s32.totalorder %s21, 1
      %p154 = por %p152, %p153
      %p156 = scmp.ne.s32.totalorder %s141, %s155
      %p157 = scmp.eq.s32.totalorder %s21, 0
      %p158 = por %p156, %p157
      %s159 = ssub.s32 %s15, %s22
      %p160 = scmp.eq.s32.totalorder %s159, 0
      %s162 = sadd.s32 %s161, 1
      %s163 = scalar_select %p160, %s161, %s162
      %p166 = pneg %p160
      %p167 = scmp.eq.s32.totalorder %s15, 1
      %p168 = por %p166, %p167
      %p169 = scmp.ne.s32.totalorder %s161, %s164
      %p170 = scmp.eq.s32.totalorder %s15, 0
      %p171 = por %p169, %p170
      %p172 = scmp.ne.s32.totalorder %s161, %s164
      %p173 = scmp.eq.s32.totalorder %s20, 1
      %p174 = por %p172, %p173
      %p175 = scmp.ne.s32.totalorder %s164, %s165
      %p176 = scmp.eq.s32.totalorder %s20, 0
      %p177 = por %p175, %p176
      %p178 = scmp.ne.s32.totalorder %s164, %s165
      %p179 = scmp.eq.s32.totalorder %s21, 1
      %p180 = por %p178, %p179
      %p182 = scmp.ne.s32.totalorder %s165, %s181
      %p183 = scmp.eq.s32.totalorder %s21, 0
      %p184 = por %p182, %p183
      %p185 = scmp.le.s32.totalorder 1, %s15
      %p186 = scmp.lt.s32.totalorder %s15, 3
      %p187 = pnand %p185, %p186
      %p188 = pneg %p187
      // Predicated region
      $region9: #{multi_head_attention.1} parent=5 // pred_check
        _
      $region10: #{multi_head_attention.1} parent=5 // pred_check_branch
        %190 = sbr.rel (%p187) target = $region12
      $region11: #{multi_head_attention.1} parent=5 // pred_region
        %s191 = ssub.s32 %s15, 1
        // Predicated region
        $region13: #{multi_head_attention.1} parent=11 // pred_check
          %p192 = pneg %p88
        $region14: #{multi_head_attention.1} parent=11 // pred_check_branch
          %194 = sbr.rel (%p192) target = $region16
        $region15: #{multi_head_attention.1} parent=11 // pred_region
          _
        $region16: #{multi_head_attention.1} parent=11 // pred_fallthru
          _
        // Predicated region
        $region17: #{multi_head_attention.1} parent=11 // pred_check
          %p195 = pneg %p109
        $region18: #{multi_head_attention.1} parent=11 // pred_check_branch
          %197 = sbr.rel (%p195) target = $region20
        $region19: #{multi_head_attention.1} parent=11 // pred_region
          _
        $region20: #{multi_head_attention.1} parent=11 // pred_fallthru
          _
        // Predicated region
        $region21: #{multi_head_attention.1} parent=11 // pred_check
          %p198 = pneg %p130
        $region22: #{multi_head_attention.1} parent=11 // pred_check_branch
          %200 = sbr.rel (%p198) target = $region24
        $region23: #{multi_head_attention.1} parent=11 // pred_region
          _
        $region24: #{multi_head_attention.1} parent=11 // pred_fallthru
          _
        // Predicated region
        $region25: #{multi_head_attention.1} parent=11 // pred_check
          %p201 = pneg %p151
        $region26: #{multi_head_attention.1} parent=11 // pred_check_branch
          %203 = sbr.rel (%p201) target = $region28
        $region27: #{multi_head_attention.1} parent=11 // pred_region
          _
        $region28: #{multi_head_attention.1} parent=11 // pred_fallthru
          _
      $region12: #{multi_head_attention.1} parent=5 // pred_fallthru
        _
      %p204 = scmp.lt.s32.totalorder %s15, 2
      // Predicated region
      $region29: #{multi_head_attention.1} parent=5 // pred_check
        %p205 = pneg %p204
      $region30: #{multi_head_attention.1} parent=5 // pred_check_branch
        %207 = sbr.rel (%p205) target = $region32
      $region31: #{multi_head_attention.1} parent=5 // pred_region
        // Predicated region
        $region33: #{multi_head_attention.1} parent=31 // pred_check
          %p208 = pneg %p35
        $region34: #{multi_head_attention.1} parent=31 // pred_check_branch
          %210 = sbr.rel (%p208) target = $region36
        $region35: #{multi_head_attention.1} parent=31 // pred_region
          %p211 = scmp.lt.s32.totalorder %s15, 1
          %s212 = scalar_select %p211, %s15, 1
          %s213 = smul.addr %s212, 16
          %s214 = smul.addr %s213, 8
          %s215 = scalar_lea.vmem %s0, %s214
        $region36: #{multi_head_attention.1} parent=31 // pred_fallthru
          _
        // Predicated region
        $region37: #{multi_head_attention.1} parent=31 // pred_check
          %p216 = pneg %p61
        $region38: #{multi_head_attention.1} parent=31 // pred_check_branch
          %218 = sbr.rel (%p216) target = $region40
        $region39: #{multi_head_attention.1} parent=31 // pred_region
          %p219 = scmp.lt.s32.totalorder %s15, 1
          %s220 = scalar_select %p219, %s15, 1
          %s221 = smul.addr %s220, 16
          %s222 = smul.addr %s221, 8
          %s223 = scalar_lea.vmem %s1, %s222
        $region40: #{multi_head_attention.1} parent=31 // pred_fallthru
          _
      $region32: #{multi_head_attention.1} parent=5 // pred_fallthru
        _
      %p224 = scmp.le.s32.totalorder 1, %s15
      %p225 = scmp.lt.s32.totalorder %s15, 3
      %p226 = pnand %p224, %p225
      %p227 = pneg %p226
      // Predicated region
      $region41: #{multi_head_attention.1} parent=5 // pred_check
        _
      $region42: #{multi_head_attention.1} parent=5 // pred_check_branch
        %229 = sbr.rel (%p226) target = $region44
      $region43: #{multi_head_attention.1} parent=5 // pred_region
        %s230 = ssub.s32 %s15, 1
        %p231 = scmp.lt.s32.totalorder %s20, 1
        %s232 = scalar_select %p231, %s20, 1
        %s233 = smul.addr %s232, 16
        %s234 = smul.addr %s233, 8
        %s235 = scalar_lea.vmem %s0, %s234
        %p236 = pneg %p41
        %p237 = pneg %p38
        %p238 = scmp.lt.s32.totalorder %s20, 1
        %s239 = scalar_select %p238, %s20, 1
        %s240 = smul.addr %s239, 16
        %s241 = smul.addr %s240, 8
        %s242 = scalar_lea.vmem %s1, %s241
        %p243 = pneg %p67
        %p244 = pneg %p64
        %p245 = pneg %p88
        %p246 = pneg %p85
        %p247 = pneg %p109
        %p248 = pneg %p106
        %p249 = pneg %p130
        %p250 = pneg %p127
        %p251 = pneg %p151
        %p252 = pneg %p148
        %p253 = pneg %p177
        %p254 = pneg %p174
        %s255 = sand.u32 %s164, 1
        %s256 = scalar_lea.sflag [#allocation4], %s255
        %s257 = sand.u32 %s164, 1
        %s258 = smul.addr %s257, 128
        %s259 = scalar_lea.vmem [#allocation3], %s258
        %p260 = scmp.lt.s32.totalorder %s20, 1
        %s261 = scalar_select %p260, %s20, 1
        %s262 = smul.addr %s261, 16
        %s263 = smul.addr %s262, 8
        %s264 = scalar_lea.vmem %s0, %s263
        %p265 = scmp.lt.s32.totalorder %s20, 1
        %s266 = scalar_select %p265, %s20, 1
        %s267 = smul.addr %s266, 16
        %s268 = smul.addr %s267, 8
        %s269 = scalar_lea.vmem %s1, %s268
        %v270 = vld [vmem:[%s269] sm:$0xff]
        %v271 = vld [vmem:[%s269 + $0x8] sm:$0xff]
        %v272 = vld [vmem:[%s269 + $0x10] sm:$0xff]
        %v273 = vld [vmem:[%s269 + $0x18] sm:$0xff]
        %v274 = vld [vmem:[%s269 + $0x20] sm:$0xff]
        %v275 = vld [vmem:[%s269 + $0x28] sm:$0xff]
        %v276 = vld [vmem:[%s269 + $0x30] sm:$0xff]
        %v277 = vld [vmem:[%s269 + $0x38] sm:$0xff]
        %v278 = vld [vmem:[%s269 + $0x40] sm:$0xff]
        %v279 = vld [vmem:[%s269 + $0x48] sm:$0xff]
        %v280 = vld [vmem:[%s269 + $0x50] sm:$0xff]
        %v281 = vld [vmem:[%s269 + $0x58] sm:$0xff]
        %v282 = vld [vmem:[%s269 + $0x60] sm:$0xff]
        %v283 = vld [vmem:[%s269 + $0x68] sm:$0xff]
        %v284 = vld [vmem:[%s269 + $0x70] sm:$0xff]
        %v285 = vld [vmem:[%s269 + $0x78] sm:$0xff]
        %v286 = vld [vmem:[%s264] sm:$0xff]
        %v287 = vld [vmem:[%s264 + $0x8] sm:$0xff]
        %v288 = vld [vmem:[%s264 + $0x10] sm:$0xff]
        %v289 = vld [vmem:[%s264 + $0x18] sm:$0xff]
        %v290 = vld [vmem:[%s264 + $0x20] sm:$0xff]
        %v291 = vld [vmem:[%s264 + $0x28] sm:$0xff]
        %v292 = vld [vmem:[%s264 + $0x30] sm:$0xff]
        %v293 = vld [vmem:[%s264 + $0x38] sm:$0xff]
        %v294 = vld [vmem:[%s264 + $0x40] sm:$0xff]
        %v295 = vld [vmem:[%s264 + $0x48] sm:$0xff]
        %v296 = vld [vmem:[%s264 + $0x50] sm:$0xff]
        %v297 = vld [vmem:[%s264 + $0x58] sm:$0xff]
        %v298 = vld [vmem:[%s264 + $0x60] sm:$0xff]
        %v299 = vld [vmem:[%s264 + $0x68] sm:$0xff]
        %v300 = vld [vmem:[%s264 + $0x70] sm:$0xff]
        %v301 = vld [vmem:[%s264 + $0x78] sm:$0xff]
        %vm302 = vcmp.eq.f32.partialorder %v286, 0.0
        %vm303 = vcmp.eq.f32.partialorder %v287, 0.0
        %vm304 = vcmp.eq.f32.partialorder %v288, 0.0
        %vm305 = vcmp.eq.f32.partialorder %v289, 0.0
        %vm306 = vcmp.eq.f32.partialorder %v290, 0.0
        %vm307 = vcmp.eq.f32.partialorder %v291, 0.0
        %vm308 = vcmp.eq.f32.partialorder %v292, 0.0
        %vm309 = vcmp.eq.f32.partialorder %v293, 0.0
        %vm310 = vcmp.eq.f32.partialorder %v294, 0.0
        %vm311 = vcmp.eq.f32.partialorder %v295, 0.0
        %vm312 = vcmp.eq.f32.partialorder %v296, 0.0
        %vm313 = vcmp.eq.f32.partialorder %v297, 0.0
        %vm314 = vcmp.eq.f32.partialorder %v298, 0.0
        %vm315 = vcmp.eq.f32.partialorder %v299, 0.0
        %vm316 = vcmp.eq.f32.partialorder %v300, 0.0
        %vm317 = vcmp.eq.f32.partialorder %v301, 0.0
        %v318 = vsel %vm302, -1e+09, 0.0
        %v319 = vsel %vm303, -1e+09, 0.0
        %v320 = vsel %vm304, -1e+09, 0.0
        %v321 = vsel %vm305, -1e+09, 0.0
        %v322 = vsel %vm306, -1e+09, 0.0
        %v323 = vsel %vm307, -1e+09, 0.0
        %v324 = vsel %vm308, -1e+09, 0.0
        %v325 = vsel %vm309, -1e+09, 0.0
        %v326 = vsel %vm310, -1e+09, 0.0
        %v327 = vsel %vm311, -1e+09, 0.0
        %v328 = vsel %vm312, -1e+09, 0.0
        %v329 = vsel %vm313, -1e+09, 0.0
        %v330 = vsel %vm314, -1e+09, 0.0
        %v331 = vsel %vm315, -1e+09, 0.0
        %v332 = vsel %vm316, -1e+09, 0.0
        %v333 = vsel %vm317, -1e+09, 0.0
        %v334 = vld [vmem:[%s2] sm:$0xff]
        %v335 = vld [vmem:[%s2 + $0x8] sm:$0xff]
        %v336 = vld [vmem:[%s2 + $0x10] sm:$0xff]
        %v337 = vld [vmem:[%s2 + $0x18] sm:$0xff]
        %v338 = vld [vmem:[%s2 + $0x20] sm:$0xff]
        %v339 = vld [vmem:[%s2 + $0x28] sm:$0xff]
        %v340 = vld [vmem:[%s2 + $0x30] sm:$0xff]
        %v341 = vld [vmem:[%s2 + $0x38] sm:$0xff]
        %v342 = vld [vmem:[%s2 + $0x40] sm:$0xff]
        %v343 = vld [vmem:[%s2 + $0x48] sm:$0xff]
        %v344 = vld [vmem:[%s2 + $0x50] sm:$0xff]
        %v345 = vld [vmem:[%s2 + $0x58] sm:$0xff]
        %v346 = vld [vmem:[%s2 + $0x60] sm:$0xff]
        %v347 = vld [vmem:[%s2 + $0x68] sm:$0xff]
        %v348 = vld [vmem:[%s2 + $0x70] sm:$0xff]
        %v349 = vld [vmem:[%s2 + $0x78] sm:$0xff]
        %350 = vmatpush.msra.mxu0 %v349
        %351 = vmatpush.msra.mxu0 %v348
        %352 = vmatpush.msra.mxu0 %v347
        %353 = vmatpush.msra.mxu0 %v346
        %354 = vmatpush.msra.mxu0 %v345
        %355 = vmatpush.msra.mxu0 %v344
        %356 = vmatpush.msra.mxu0 %v343
        %357 = vmatpush.msra.mxu0 %v342
        %358 = vmatpush.msra.mxu0 %v341
        %359 = vmatpush.msra.mxu0 %v340
        %360 = vmatpush.msra.mxu0 %v339
        %361 = vmatpush.msra.mxu0 %v338
        %362 = vmatpush.msra.mxu0 %v337
        %363 = vmatpush.msra.mxu0 %v336
        %364 = vmatpush.msra.mxu0 %v335
        %365 = vmatpush.msra.mxu0 %v334
        %366 = vmatmul.f32.gmra.mxu0 %v270
        %v367 = vpop.f32.mrf.mxu0
        %v368 = vadd.f32 0.0, %v367
        %369 = vmatmul.f32.gmra.mxu0 %v271
        %v370 = vpop.f32.mrf.mxu0
        %v371 = vadd.f32 0.0, %v370
        %372 = vmatmul.f32.gmra.mxu0 %v272
        %v373 = vpop.f32.mrf.mxu0
        %v374 = vadd.f32 0.0, %v373
        %375 = vmatmul.f32.gmra.mxu0 %v273
        %v376 = vpop.f32.mrf.mxu0
        %v377 = vadd.f32 0.0, %v376
        %378 = vmatmul.f32.gmra.mxu0 %v274
        %v379 = vpop.f32.mrf.mxu0
        %v380 = vadd.f32 0.0, %v379
        %381 = vmatmul.f32.gmra.mxu0 %v275
        %v382 = vpop.f32.mrf.mxu0
        %v383 = vadd.f32 0.0, %v382
        %384 = vmatmul.f32.gmra.mxu0 %v276
        %v385 = vpop.f32.mrf.mxu0
        %v386 = vadd.f32 0.0, %v385
        %387 = vmatmul.f32.gmra.mxu0 %v277
        %v388 = vpop.f32.mrf.mxu0
        %v389 = vadd.f32 0.0, %v388
        %390 = vmatmul.f32.gmra.mxu0 %v278
        %v391 = vpop.f32.mrf.mxu0
        %v392 = vadd.f32 0.0, %v391
        %393 = vmatmul.f32.gmra.mxu0 %v279
        %v394 = vpop.f32.mrf.mxu0
        %v395 = vadd.f32 0.0, %v394
        %396 = vmatmul.f32.gmra.mxu0 %v280
        %v397 = vpop.f32.mrf.mxu0
        %v398 = vadd.f32 0.0, %v397
        %399 = vmatmul.f32.gmra.mxu0 %v281
        %v400 = vpop.f32.mrf.mxu0
        %v401 = vadd.f32 0.0, %v400
        %402 = vmatmul.f32.gmra.mxu0 %v282
        %v403 = vpop.f32.mrf.mxu0
        %v404 = vadd.f32 0.0, %v403
        %405 = vmatmul.f32.gmra.mxu0 %v283
        %v406 = vpop.f32.mrf.mxu0
        %v407 = vadd.f32 0.0, %v406
        %408 = vmatmul.f32.gmra.mxu0 %v284
        %v409 = vpop.f32.mrf.mxu0
        %v410 = vadd.f32 0.0, %v409
        %411 = vmatmul.f32.gmra.mxu0 %v285
        %v412 = vpop.f32.mrf.mxu0
        %v413 = vadd.f32 0.0, %v412
        %414 = vdwg.mxu0
        %v415 = vld [vmem:[%s3] sm:$0xff]
        %v416 = vld [vmem:[%s3 + $0x8] sm:$0xff]
        %v417 = vld [vmem:[%s3 + $0x10] sm:$0xff]
        %v418 = vld [vmem:[%s3 + $0x18] sm:$0xff]
        %v419 = vld [vmem:[%s3 + $0x20] sm:$0xff]
        %v420 = vld [vmem:[%s3 + $0x28] sm:$0xff]
        %v421 = vld [vmem:[%s3 + $0x30] sm:$0xff]
        %v422 = vld [vmem:[%s3 + $0x38] sm:$0xff]
        %v423 = vld [vmem:[%s3 + $0x40] sm:$0xff]
        %v424 = vld [vmem:[%s3 + $0x48] sm:$0xff]
        %v425 = vld [vmem:[%s3 + $0x50] sm:$0xff]
        %v426 = vld [vmem:[%s3 + $0x58] sm:$0xff]
        %v427 = vld [vmem:[%s3 + $0x60] sm:$0xff]
        %v428 = vld [vmem:[%s3 + $0x68] sm:$0xff]
        %v429 = vld [vmem:[%s3 + $0x70] sm:$0xff]
        %v430 = vld [vmem:[%s3 + $0x78] sm:$0xff]
        %431 = vmatpush.msra.mxu0 %v430
        %432 = vmatpush.msra.mxu0 %v429
        %433 = vmatpush.msra.mxu0 %v428
        %434 = vmatpush.msra.mxu0 %v427
        %435 = vmatpush.msra.mxu0 %v426
        %436 = vmatpush.msra.mxu0 %v425
        %437 = vmatpush.msra.mxu0 %v424
        %438 = vmatpush.msra.mxu0 %v423
        %439 = vmatpush.msra.mxu0 %v422
        %440 = vmatpush.msra.mxu0 %v421
        %441 = vmatpush.msra.mxu0 %v420
        %442 = vmatpush.msra.mxu0 %v419
        %443 = vmatpush.msra.mxu0 %v418
        %444 = vmatpush.msra.mxu0 %v417
        %445 = vmatpush.msra.mxu0 %v416
        %446 = vmatpush.msra.mxu0 %v415
        %447 = vmatmul.f32.gmra.mxu0 %v270
        %v448 = vpop.f32.mrf.mxu0
        %v449 = vadd.f32 0.0, %v448
        %450 = vmatmul.f32.gmra.mxu0 %v271
        %v451 = vpop.f32.mrf.mxu0
        %v452 = vadd.f32 0.0, %v451
        %453 = vmatmul.f32.gmra.mxu0 %v272
        %v454 = vpop.f32.mrf.mxu0
        %v455 = vadd.f32 0.0, %v454
        %456 = vmatmul.f32.gmra.mxu0 %v273
        %v457 = vpop.f32.mrf.mxu0
        %v458 = vadd.f32 0.0, %v457
        %459 = vmatmul.f32.gmra.mxu0 %v274
        %v460 = vpop.f32.mrf.mxu0
        %v461 = vadd.f32 0.0, %v460
        %462 = vmatmul.f32.gmra.mxu0 %v275
        %v463 = vpop.f32.mrf.mxu0
        %v464 = vadd.f32 0.0, %v463
        %465 = vmatmul.f32.gmra.mxu0 %v276
        %v466 = vpop.f32.mrf.mxu0
        %v467 = vadd.f32 0.0, %v466
        %468 = vmatmul.f32.gmra.mxu0 %v277
        %v469 = vpop.f32.mrf.mxu0
        %v470 = vadd.f32 0.0, %v469
        %471 = vmatmul.f32.gmra.mxu0 %v278
        %v472 = vpop.f32.mrf.mxu0
        %v473 = vadd.f32 0.0, %v472
        %474 = vmatmul.f32.gmra.mxu0 %v279
        %v475 = vpop.f32.mrf.mxu0
        %v476 = vadd.f32 0.0, %v475
        %477 = vmatmul.f32.gmra.mxu0 %v280
        %v478 = vpop.f32.mrf.mxu0
        %v479 = vadd.f32 0.0, %v478
        %480 = vmatmul.f32.gmra.mxu0 %v281
        %v481 = vpop.f32.mrf.mxu0
        %v482 = vadd.f32 0.0, %v481
        %483 = vmatmul.f32.gmra.mxu0 %v282
        %v484 = vpop.f32.mrf.mxu0
        %v485 = vadd.f32 0.0, %v484
        %486 = vmatmul.f32.gmra.mxu0 %v283
        %v487 = vpop.f32.mrf.mxu0
        %v488 = vadd.f32 0.0, %v487
        %489 = vmatmul.f32.gmra.mxu0 %v284
        %v490 = vpop.f32.mrf.mxu0
        %v491 = vadd.f32 0.0, %v490
        %492 = vmatmul.f32.gmra.mxu0 %v285
        %v493 = vpop.f32.mrf.mxu0
        %v494 = vadd.f32 0.0, %v493
        %495 = vdwg.mxu0
        %v496 = vld [vmem:[%s4] sm:$0xff]
        %v497 = vld [vmem:[%s4 + $0x8] sm:$0xff]
        %v498 = vld [vmem:[%s4 + $0x10] sm:$0xff]
        %v499 = vld [vmem:[%s4 + $0x18] sm:$0xff]
        %v500 = vld [vmem:[%s4 + $0x20] sm:$0xff]
        %v501 = vld [vmem:[%s4 + $0x28] sm:$0xff]
        %v502 = vld [vmem:[%s4 + $0x30] sm:$0xff]
        %v503 = vld [vmem:[%s4 + $0x38] sm:$0xff]
        %v504 = vld [vmem:[%s4 + $0x40] sm:$0xff]
        %v505 = vld [vmem:[%s4 + $0x48] sm:$0xff]
        %v506 = vld [vmem:[%s4 + $0x50] sm:$0xff]
        %v507 = vld [vmem:[%s4 + $0x58] sm:$0xff]
        %v508 = vld [vmem:[%s4 + $0x60] sm:$0xff]
        %v509 = vld [vmem:[%s4 + $0x68] sm:$0xff]
        %v510 = vld [vmem:[%s4 + $0x70] sm:$0xff]
        %v511 = vld [vmem:[%s4 + $0x78] sm:$0xff]
        %512 = vmatpush.msra.mxu0 %v511
        %513 = vmatpush.msra.mxu0 %v510
        %514 = vmatpush.msra.mxu0 %v509
        %515 = vmatpush.msra.mxu0 %v508
        %516 = vmatpush.msra.mxu0 %v507
        %517 = vmatpush.msra.mxu0 %v506
        %518 = vmatpush.msra.mxu0 %v505
        %519 = vmatpush.msra.mxu0 %v504
        %520 = vmatpush.msra.mxu0 %v503
        %521 = vmatpush.msra.mxu0 %v502
        %522 = vmatpush.msra.mxu0 %v501
        %523 = vmatpush.msra.mxu0 %v500
        %524 = vmatpush.msra.mxu0 %v499
        %525 = vmatpush.msra.mxu0 %v498
        %526 = vmatpush.msra.mxu0 %v497
        %527 = vmatpush.msra.mxu0 %v496
        %528 = vmatmul.f32.gmra.mxu0 %v270
        %v529 = vpop.f32.mrf.mxu0
        %v530 = vadd.f32 0.0, %v529
        %531 = vmatmul.f32.gmra.mxu0 %v271
        %v532 = vpop.f32.mrf.mxu0
        %v533 = vadd.f32 0.0, %v532
        %534 = vmatmul.f32.gmra.mxu0 %v272
        %v535 = vpop.f32.mrf.mxu0
        %v536 = vadd.f32 0.0, %v535
        %537 = vmatmul.f32.gmra.mxu0 %v273
        %v538 = vpop.f32.mrf.mxu0
        %v539 = vadd.f32 0.0, %v538
        %540 = vmatmul.f32.gmra.mxu0 %v274
        %v541 = vpop.f32.mrf.mxu0
        %v542 = vadd.f32 0.0, %v541
        %543 = vmatmul.f32.gmra.mxu0 %v275
        %v544 = vpop.f32.mrf.mxu0
        %v545 = vadd.f32 0.0, %v544
        %546 = vmatmul.f32.gmra.mxu0 %v276
        %v547 = vpop.f32.mrf.mxu0
        %v548 = vadd.f32 0.0, %v547
        %549 = vmatmul.f32.gmra.mxu0 %v277
        %v550 = vpop.f32.mrf.mxu0
        %v551 = vadd.f32 0.0, %v550
        %552 = vmatmul.f32.gmra.mxu0 %v278
        %v553 = vpop.f32.mrf.mxu0
        %v554 = vadd.f32 0.0, %v553
        %555 = vmatmul.f32.gmra.mxu0 %v279
        %v556 = vpop.f32.mrf.mxu0
        %v557 = vadd.f32 0.0, %v556
        %558 = vmatmul.f32.gmra.mxu0 %v280
        %v559 = vpop.f32.mrf.mxu0
        %v560 = vadd.f32 0.0, %v559
        %561 = vmatmul.f32.gmra.mxu0 %v281
        %v562 = vpop.f32.mrf.mxu0
        %v563 = vadd.f32 0.0, %v562
        %564 = vmatmul.f32.gmra.mxu0 %v282
        %v565 = vpop.f32.mrf.mxu0
        %v566 = vadd.f32 0.0, %v565
        %567 = vmatmul.f32.gmra.mxu0 %v283
        %v568 = vpop.f32.mrf.mxu0
        %v569 = vadd.f32 0.0, %v568
        %570 = vmatmul.f32.gmra.mxu0 %v284
        %v571 = vpop.f32.mrf.mxu0
        %v572 = vadd.f32 0.0, %v571
        %573 = vmatmul.f32.gmra.mxu0 %v285
        %v574 = vpop.f32.mrf.mxu0
        %v575 = vadd.f32 0.0, %v574
        %576 = vdwg.mxu0
        %vm577 = vcmask 261120
        %v579 = vsel %vm577, %v368, 0
        %v582 = vsel %vm577, %v371, 0
        %v585 = vsel %vm577, %v374, 0
        %v588 = vsel %vm577, %v377, 0
        %v591 = vsel %vm577, %v380, 0
        %v594 = vsel %vm577, %v383, 0
        %v597 = vsel %vm577, %v386, 0
        %v600 = vsel %vm577, %v389, 0
        %v603 = vsel %vm577, %v392, 0
        %v606 = vsel %vm577, %v395, 0
        %v609 = vsel %vm577, %v398, 0
        %v612 = vsel %vm577, %v401, 0
        %v615 = vsel %vm577, %v404, 0
        %v618 = vsel %vm577, %v407, 0
        %v621 = vsel %vm577, %v410, 0
        %v624 = vsel %vm577, %v413, 0
        %v627 = vsel %vm577, %v449, 0
        %v630 = vsel %vm577, %v452, 0
        %v633 = vsel %vm577, %v455, 0
        %v636 = vsel %vm577, %v458, 0
        %v639 = vsel %vm577, %v461, 0
        %v642 = vsel %vm577, %v464, 0
        %v645 = vsel %vm577, %v467, 0
        %v648 = vsel %vm577, %v470, 0
        %v651 = vsel %vm577, %v473, 0
        %v654 = vsel %vm577, %v476, 0
        %v657 = vsel %vm577, %v479, 0
        %v660 = vsel %vm577, %v482, 0
        %v663 = vsel %vm577, %v485, 0
        %v666 = vsel %vm577, %v488, 0
        %v669 = vsel %vm577, %v491, 0
        %v672 = vsel %vm577, %v494, 0
        %674 = vmatpush.xpose.msra.mxu0 %v672
        %675 = vmatpush.xpose.msra.mxu0 %v669
        %676 = vmatpush.xpose.msra.mxu0 %v666
        %677 = vmatpush.xpose.msra.mxu0 %v663
        %678 = vmatpush.xpose.msra.mxu0 %v660
        %679 = vmatpush.xpose.msra.mxu0 %v657
        %680 = vmatpush.xpose.msra.mxu0 %v654
        %681 = vmatpush.xpose.msra.mxu0 %v651
        %682 = vmatpush.xpose.msra.mxu0 %v648
        %683 = vmatpush.xpose.msra.mxu0 %v645
        %684 = vmatpush.xpose.msra.mxu0 %v642
        %685 = vmatpush.xpose.msra.mxu0 %v639
        %686 = vmatpush.xpose.msra.mxu0 %v636
        %687 = vmatpush.xpose.msra.mxu0 %v633
        %688 = vmatpush.xpose.msra.mxu0 %v630
        %689 = vmatpush.xpose.msra.mxu0 %v627
        %690 = vmatmul.f32.gmra.mxu0 %v579
        %v691 = vpop.f32.mrf.mxu0
        %v692 = vadd.f32 %v318, %v691
        %693 = vmatmul.f32.gmra.mxu0 %v582
        %v694 = vpop.f32.mrf.mxu0
        %v695 = vadd.f32 %v319, %v694
        %696 = vmatmul.f32.gmra.mxu0 %v585
        %v697 = vpop.f32.mrf.mxu0
        %v698 = vadd.f32 %v320, %v697
        %699 = vmatmul.f32.gmra.mxu0 %v588
        %v700 = vpop.f32.mrf.mxu0
        %v701 = vadd.f32 %v321, %v700
        %702 = vmatmul.f32.gmra.mxu0 %v591
        %v703 = vpop.f32.mrf.mxu0
        %v704 = vadd.f32 %v322, %v703
        %705 = vmatmul.f32.gmra.mxu0 %v594
        %v706 = vpop.f32.mrf.mxu0
        %v707 = vadd.f32 %v323, %v706
        %708 = vmatmul.f32.gmra.mxu0 %v597
        %v709 = vpop.f32.mrf.mxu0
        %v710 = vadd.f32 %v324, %v709
        %711 = vmatmul.f32.gmra.mxu0 %v600
        %v712 = vpop.f32.mrf.mxu0
        %v713 = vadd.f32 %v325, %v712
        %714 = vmatmul.f32.gmra.mxu0 %v603
        %v715 = vpop.f32.mrf.mxu0
        %v716 = vadd.f32 %v326, %v715
        %717 = vmatmul.f32.gmra.mxu0 %v606
        %v718 = vpop.f32.mrf.mxu0
        %v719 = vadd.f32 %v327, %v718
        %720 = vmatmul.f32.gmra.mxu0 %v609
        %v721 = vpop.f32.mrf.mxu0
        %v722 = vadd.f32 %v328, %v721
        %723 = vmatmul.f32.gmra.mxu0 %v612
        %v724 = vpop.f32.mrf.mxu0
        %v725 = vadd.f32 %v329, %v724
        %726 = vmatmul.f32.gmra.mxu0 %v615
        %v727 = vpop.f32.mrf.mxu0
        %v728 = vadd.f32 %v330, %v727
        %729 = vmatmul.f32.gmra.mxu0 %v618
        %v730 = vpop.f32.mrf.mxu0
        %v731 = vadd.f32 %v331, %v730
        %732 = vmatmul.f32.gmra.mxu0 %v621
        %v733 = vpop.f32.mrf.mxu0
        %v734 = vadd.f32 %v332, %v733
        %735 = vmatmul.f32.gmra.mxu0 %v624
        %v736 = vpop.f32.mrf.mxu0
        %v737 = vadd.f32 %v333, %v736
        %738 = vdwg.mxu0
        %739 = vmax.xlane.f32.xlu0 %v692
        %v740 = vpop.xlane.xlu0 %739
        %741 = vmax.xlane.f32.xlu0 %v695
        %v742 = vpop.xlane.xlu0 %741
        %743 = vmax.xlane.f32.xlu0 %v698
        %v744 = vpop.xlane.xlu0 %743
        %745 = vmax.xlane.f32.xlu0 %v701
        %v746 = vpop.xlane.xlu0 %745
        %747 = vmax.xlane.f32.xlu0 %v704
        %v748 = vpop.xlane.xlu0 %747
        %749 = vmax.xlane.f32.xlu0 %v707
        %v750 = vpop.xlane.xlu0 %749
        %751 = vmax.xlane.f32.xlu0 %v710
        %v752 = vpop.xlane.xlu0 %751
        %753 = vmax.xlane.f32.xlu0 %v713
        %v754 = vpop.xlane.xlu0 %753
        %755 = vmax.xlane.f32.xlu0 %v716
        %v756 = vpop.xlane.xlu0 %755
        %757 = vmax.xlane.f32.xlu0 %v719
        %v758 = vpop.xlane.xlu0 %757
        %759 = vmax.xlane.f32.xlu0 %v722
        %v760 = vpop.xlane.xlu0 %759
        %761 = vmax.xlane.f32.xlu0 %v725
        %v762 = vpop.xlane.xlu0 %761
        %763 = vmax.xlane.f32.xlu0 %v728
        %v764 = vpop.xlane.xlu0 %763
        %765 = vmax.xlane.f32.xlu0 %v731
        %v766 = vpop.xlane.xlu0 %765
        %767 = vmax.xlane.f32.xlu0 %v734
        %v768 = vpop.xlane.xlu0 %767
        %769 = vmax.xlane.f32.xlu0 %v737
        %v770 = vpop.xlane.xlu0 %769
        %v771 = vsub.f32 %v692, %v740
        %v772 = vsub.f32 %v695, %v742
        %v773 = vsub.f32 %v698, %v744
        %v774 = vsub.f32 %v701, %v746
        %v775 = vsub.f32 %v704, %v748
        %v776 = vsub.f32 %v707, %v750
        %v777 = vsub.f32 %v710, %v752
        %v778 = vsub.f32 %v713, %v754
        %v779 = vsub.f32 %v716, %v756
        %v780 = vsub.f32 %v719, %v758
        %v781 = vsub.f32 %v722, %v760
        %v782 = vsub.f32 %v725, %v762
        %v783 = vsub.f32 %v728, %v764
        %v784 = vsub.f32 %v731, %v766
        %v785 = vsub.f32 %v734, %v768
        %v786 = vsub.f32 %v737, %v770
        %v787 = vmul.f32 %v771, 1.442695
        %v788 = vpow.pop %v787
        %v789 = vmul.f32 %v772, 1.442695
        %v790 = vpow.pop %v789
        %v791 = vmul.f32 %v773, 1.442695
        %v792 = vpow.pop %v791
        %v793 = vmul.f32 %v774, 1.442695
        %v794 = vpow.pop %v793
        %v795 = vmul.f32 %v775, 1.442695
        %v796 = vpow.pop %v795
        %v797 = vmul.f32 %v776, 1.442695
        %v798 = vpow.pop %v797
        %v799 = vmul.f32 %v777, 1.442695
        %v800 = vpow.pop %v799
        %v801 = vmul.f32 %v778, 1.442695
        %v802 = vpow.pop %v801
        %v803 = vmul.f32 %v779, 1.442695
        %v804 = vpow.pop %v803
        %v805 = vmul.f32 %v780, 1.442695
        %v806 = vpow.pop %v805
        %v807 = vmul.f32 %v781, 1.442695
        %v808 = vpow.pop %v807
        %v809 = vmul.f32 %v782, 1.442695
        %v810 = vpow.pop %v809
        %v811 = vmul.f32 %v783, 1.442695
        %v812 = vpow.pop %v811
        %v813 = vmul.f32 %v784, 1.442695
        %v814 = vpow.pop %v813
        %v815 = vmul.f32 %v785, 1.442695
        %v816 = vpow.pop %v815
        %v817 = vmul.f32 %v786, 1.442695
        %v818 = vpow.pop %v817
        %819 = vadd.xlane.f32.xlu0 %v788
        %v820 = vpop.xlane.xlu0 %819
        %821 = vadd.xlane.f32.xlu0 %v790
        %v822 = vpop.xlane.xlu0 %821
        %823 = vadd.xlane.f32.xlu0 %v792
        %v824 = vpop.xlane.xlu0 %823
        %825 = vadd.xlane.f32.xlu0 %v794
        %v826 = vpop.xlane.xlu0 %825
        %827 = vadd.xlane.f32.xlu0 %v796
        %v828 = vpop.xlane.xlu0 %827
        %829 = vadd.xlane.f32.xlu0 %v798
        %v830 = vpop.xlane.xlu0 %829
        %831 = vadd.xlane.f32.xlu0 %v800
        %v832 = vpop.xlane.xlu0 %831
        %833 = vadd.xlane.f32.xlu0 %v802
        %v834 = vpop.xlane.xlu0 %833
        %835 = vadd.xlane.f32.xlu0 %v804
        %v836 = vpop.xlane.xlu0 %835
        %837 = vadd.xlane.f32.xlu0 %v806
        %v838 = vpop.xlane.xlu0 %837
        %839 = vadd.xlane.f32.xlu0 %v808
        %v840 = vpop.xlane.xlu0 %839
        %841 = vadd.xlane.f32.xlu0 %v810
        %v842 = vpop.xlane.xlu0 %841
        %843 = vadd.xlane.f32.xlu0 %v812
        %v844 = vpop.xlane.xlu0 %843
        %845 = vadd.xlane.f32.xlu0 %v814
        %v846 = vpop.xlane.xlu0 %845
        %847 = vadd.xlane.f32.xlu0 %v816
        %v848 = vpop.xlane.xlu0 %847
        %849 = vadd.xlane.f32.xlu0 %v818
        %v850 = vpop.xlane.xlu0 %849
        %851 = vmatpush.msra.mxu0 %v575
        %852 = vmatpush.msra.mxu0 %v572
        %853 = vmatpush.msra.mxu0 %v569
        %854 = vmatpush.msra.mxu0 %v566
        %855 = vmatpush.msra.mxu0 %v563
        %856 = vmatpush.msra.mxu0 %v560
        %857 = vmatpush.msra.mxu0 %v557
        %858 = vmatpush.msra.mxu0 %v554
        %859 = vmatpush.msra.mxu0 %v551
        %860 = vmatpush.msra.mxu0 %v548
        %861 = vmatpush.msra.mxu0 %v545
        %862 = vmatpush.msra.mxu0 %v542
        %863 = vmatpush.msra.mxu0 %v539
        %864 = vmatpush.msra.mxu0 %v536
        %865 = vmatpush.msra.mxu0 %v533
        %866 = vmatpush.msra.mxu0 %v530
        %867 = vmatmul.f32.gmra.mxu0 %v788
        %v868 = vpop.f32.mrf.mxu0
        %v869 = vadd.f32 0.0, %v868
        %870 = vmatmul.f32.gmra.mxu0 %v790
        %v871 = vpop.f32.mrf.mxu0
        %v872 = vadd.f32 0.0, %v871
        %873 = vmatmul.f32.gmra.mxu0 %v792
        %v874 = vpop.f32.mrf.mxu0
        %v875 = vadd.f32 0.0, %v874
        %876 = vmatmul.f32.gmra.mxu0 %v794
        %v877 = vpop.f32.mrf.mxu0
        %v878 = vadd.f32 0.0, %v877
        %879 = vmatmul.f32.gmra.mxu0 %v796
        %v880 = vpop.f32.mrf.mxu0
        %v881 = vadd.f32 0.0, %v880
        %882 = vmatmul.f32.gmra.mxu0 %v798
        %v883 = vpop.f32.mrf.mxu0
        %v884 = vadd.f32 0.0, %v883
        %885 = vmatmul.f32.gmra.mxu0 %v800
        %v886 = vpop.f32.mrf.mxu0
        %v887 = vadd.f32 0.0, %v886
        %888 = vmatmul.f32.gmra.mxu0 %v802
        %v889 = vpop.f32.mrf.mxu0
        %v890 = vadd.f32 0.0, %v889
        %891 = vmatmul.f32.gmra.mxu0 %v804
        %v892 = vpop.f32.mrf.mxu0
        %v893 = vadd.f32 0.0, %v892
        %894 = vmatmul.f32.gmra.mxu0 %v806
        %v895 = vpop.f32.mrf.mxu0
        %v896 = vadd.f32 0.0, %v895
        %897 = vmatmul.f32.gmra.mxu0 %v808
        %v898 = vpop.f32.mrf.mxu0
        %v899 = vadd.f32 0.0, %v898
        %900 = vmatmul.f32.gmra.mxu0 %v810
        %v901 = vpop.f32.mrf.mxu0
        %v902 = vadd.f32 0.0, %v901
        %903 = vmatmul.f32.gmra.mxu0 %v812
        %v904 = vpop.f32.mrf.mxu0
        %v905 = vadd.f32 0.0, %v904
        %906 = vmatmul.f32.gmra.mxu0 %v814
        %v907 = vpop.f32.mrf.mxu0
        %v908 = vadd.f32 0.0, %v907
        %909 = vmatmul.f32.gmra.mxu0 %v816
        %v910 = vpop.f32.mrf.mxu0
        %v911 = vadd.f32 0.0, %v910
        %912 = vmatmul.f32.gmra.mxu0 %v818
        %v913 = vpop.f32.mrf.mxu0
        %v914 = vadd.f32 0.0, %v913
        %915 = vdwg.mxu0
        %v916 = vrcp.pop %v820
        %v917 = vrcp.pop %v822
        %v918 = vrcp.pop %v824
        %v919 = vrcp.pop %v826
        %v920 = vrcp.pop %v828
        %v921 = vrcp.pop %v830
        %v922 = vrcp.pop %v832
        %v923 = vrcp.pop %v834
        %v924 = vrcp.pop %v836
        %v925 = vrcp.pop %v838
        %v926 = vrcp.pop %v840
        %v927 = vrcp.pop %v842
        %v928 = vrcp.pop %v844
        %v929 = vrcp.pop %v846
        %v930 = vrcp.pop %v848
        %v931 = vrcp.pop %v850
        %v932 = vmul.f32 %v869, %v916
        %v933 = vmul.f32 %v872, %v917
        %v934 = vmul.f32 %v875, %v918
        %v935 = vmul.f32 %v878, %v919
        %v936 = vmul.f32 %v881, %v920
        %v937 = vmul.f32 %v884, %v921
        %v938 = vmul.f32 %v887, %v922
        %v939 = vmul.f32 %v890, %v923
        %v940 = vmul.f32 %v893, %v924
        %v941 = vmul.f32 %v896, %v925
        %v942 = vmul.f32 %v899, %v926
        %v943 = vmul.f32 %v902, %v927
        %v944 = vmul.f32 %v905, %v928
        %v945 = vmul.f32 %v908, %v929
        %v946 = vmul.f32 %v911, %v930
        %v947 = vmul.f32 %v914, %v931
        %948 = vst.msk [vmem:[#allocation2] sm:$0xff] %vm577, %v932
        %949 = vst.msk [vmem:[#allocation2 + $0x8] sm:$0xff] %vm577, %v933
        %950 = vst.msk [vmem:[#allocation2 + $0x10] sm:$0xff] %vm577, %v934
        %951 = vst.msk [vmem:[#allocation2 + $0x18] sm:$0xff] %vm577, %v935
        %952 = vst.msk [vmem:[#allocation2 + $0x20] sm:$0xff] %vm577, %v936
        %953 = vst.msk [vmem:[#allocation2 + $0x28] sm:$0xff] %vm577, %v937
        %954 = vst.msk [vmem:[#allocation2 + $0x30] sm:$0xff] %vm577, %v938
        %955 = vst.msk [vmem:[#allocation2 + $0x38] sm:$0xff] %vm577, %v939
        %956 = vst.msk [vmem:[#allocation2 + $0x40] sm:$0xff] %vm577, %v940
        %957 = vst.msk [vmem:[#allocation2 + $0x48] sm:$0xff] %vm577, %v941
        %958 = vst.msk [vmem:[#allocation2 + $0x50] sm:$0xff] %vm577, %v942
        %959 = vst.msk [vmem:[#allocation2 + $0x58] sm:$0xff] %vm577, %v943
        %960 = vst.msk [vmem:[#allocation2 + $0x60] sm:$0xff] %vm577, %v944
        %961 = vst.msk [vmem:[#allocation2 + $0x68] sm:$0xff] %vm577, %v945
        %962 = vst.msk [vmem:[#allocation2 + $0x70] sm:$0xff] %vm577, %v946
        %963 = vst.msk [vmem:[#allocation2 + $0x78] sm:$0xff] %vm577, %v947
        %964 = vrot.lane.b32.xlu0 %v368, 96
        %v965 = vpop.permute.xlu0 %964
        %966 = vrot.lane.b32.xlu0 %v371, 96
        %v967 = vpop.permute.xlu0 %966
        %968 = vrot.lane.b32.xlu0 %v374, 96
        %v969 = vpop.permute.xlu0 %968
        %970 = vrot.lane.b32.xlu0 %v377, 96
        %v971 = vpop.permute.xlu0 %970
        %972 = vrot.lane.b32.xlu0 %v380, 96
        %v973 = vpop.permute.xlu0 %972
        %974 = vrot.lane.b32.xlu0 %v383, 96
        %v975 = vpop.permute.xlu0 %974
        %976 = vrot.lane.b32.xlu0 %v386, 96
        %v977 = vpop.permute.xlu0 %976
        %978 = vrot.lane.b32.xlu0 %v389, 96
        %v979 = vpop.permute.xlu0 %978
        %980 = vrot.lane.b32.xlu0 %v392, 96
        %v981 = vpop.permute.xlu0 %980
        %982 = vrot.lane.b32.xlu0 %v395, 96
        %v983 = vpop.permute.xlu0 %982
        %984 = vrot.lane.b32.xlu0 %v398, 96
        %v985 = vpop.permute.xlu0 %984
        %986 = vrot.lane.b32.xlu0 %v401, 96
        %v987 = vpop.permute.xlu0 %986
        %988 = vrot.lane.b32.xlu0 %v404, 96
        %v989 = vpop.permute.xlu0 %988
        %990 = vrot.lane.b32.xlu0 %v407, 96
        %v991 = vpop.permute.xlu0 %990
        %992 = vrot.lane.b32.xlu0 %v410, 96
        %v993 = vpop.permute.xlu0 %992
        %994 = vrot.lane.b32.xlu0 %v413, 96
        %v995 = vpop.permute.xlu0 %994
        %996 = vrot.lane.b32.xlu0 %v449, 96
        %v997 = vpop.permute.xlu0 %996
        %998 = vrot.lane.b32.xlu0 %v452, 96
        %v999 = vpop.permute.xlu0 %998
        %1000 = vrot.lane.b32.xlu0 %v455, 96
        %v1001 = vpop.permute.xlu0 %1000
        %1002 = vrot.lane.b32.xlu0 %v458, 96
        %v1003 = vpop.permute.xlu0 %1002
        %1004 = vrot.lane.b32.xlu0 %v461, 96
        %v1005 = vpop.permute.xlu0 %1004
        %1006 = vrot.lane.b32.xlu0 %v464, 96
        %v1007 = vpop.permute.xlu0 %1006
        %1008 = vrot.lane.b32.xlu0 %v467, 96
        %v1009 = vpop.permute.xlu0 %1008
        %1010 = vrot.lane.b32.xlu0 %v470, 96
        %v1011 = vpop.permute.xlu0 %1010
        %1012 = vrot.lane.b32.xlu0 %v473, 96
        %v1013 = vpop.permute.xlu0 %1012
        %1014 = vrot.lane.b32.xlu0 %v476, 96
        %v1015 = vpop.permute.xlu0 %1014
        %1016 = vrot.lane.b32.xlu0 %v479, 96
        %v1017 = vpop.permute.xlu0 %1016
        %1018 = vrot.lane.b32.xlu0 %v482, 96
        %v1019 = vpop.permute.xlu0 %1018
        %1020 = vrot.lane.b32.xlu0 %v485, 96
        %v1021 = vpop.permute.xlu0 %1020
        %1022 = vrot.lane.b32.xlu0 %v488, 96
        %v1023 = vpop.permute.xlu0 %1022
        %1024 = vrot.lane.b32.xlu0 %v491, 96
        %v1025 = vpop.permute.xlu0 %1024
        %1026 = vrot.lane.b32.xlu0 %v494, 96
        %v1027 = vpop.permute.xlu0 %1026
        %v1028 = vsel %vm577, %v965, 0
        %v1030 = vsel %vm577, %v967, 0
        %v1032 = vsel %vm577, %v969, 0
        %v1034 = vsel %vm577, %v971, 0
        %v1036 = vsel %vm577, %v973, 0
        %v1038 = vsel %vm577, %v975, 0
        %v1040 = vsel %vm577, %v977, 0
        %v1042 = vsel %vm577, %v979, 0
        %v1044 = vsel %vm577, %v981, 0
        %v1046 = vsel %vm577, %v983, 0
        %v1048 = vsel %vm577, %v985, 0
        %v1050 = vsel %vm577, %v987, 0
        %v1052 = vsel %vm577, %v989, 0
        %v1054 = vsel %vm577, %v991, 0
        %v1056 = vsel %vm577, %v993, 0
        %v1058 = vsel %vm577, %v995, 0
        %v1060 = vsel %vm577, %v997, 0
        %v1062 = vsel %vm577, %v999, 0
        %v1064 = vsel %vm577, %v1001, 0
        %v1066 = vsel %vm577, %v1003, 0
        %v1068 = vsel %vm577, %v1005, 0
        %v1070 = vsel %vm577, %v1007, 0
        %v1072 = vsel %vm577, %v1009, 0
        %v1074 = vsel %vm577, %v1011, 0
        %v1076 = vsel %vm577, %v1013, 0
        %v1078 = vsel %vm577, %v1015, 0
        %v1080 = vsel %vm577, %v1017, 0
        %v1082 = vsel %vm577, %v1019, 0
        %v1084 = vsel %vm577, %v1021, 0
        %v1086 = vsel %vm577, %v1023, 0
        %v1088 = vsel %vm577, %v1025, 0
        %v1090 = vsel %vm577, %v1027, 0
        %1092 = vmatpush.xpose.msra.mxu0 %v1090
        %1093 = vmatpush.xpose.msra.mxu0 %v1088
        %1094 = vmatpush.xpose.msra.mxu0 %v1086
        %1095 = vmatpush.xpose.msra.mxu0 %v1084
        %1096 = vmatpush.xpose.msra.mxu0 %v1082
        %1097 = vmatpush.xpose.msra.mxu0 %v1080
        %1098 = vmatpush.xpose.msra.mxu0 %v1078
        %1099 = vmatpush.xpose.msra.mxu0 %v1076
        %1100 = vmatpush.xpose.msra.mxu0 %v1074
        %1101 = vmatpush.xpose.msra.mxu0 %v1072
        %1102 = vmatpush.xpose.msra.mxu0 %v1070
        %1103 = vmatpush.xpose.msra.mxu0 %v1068
        %1104 = vmatpush.xpose.msra.mxu0 %v1066
        %1105 = vmatpush.xpose.msra.mxu0 %v1064
        %1106 = vmatpush.xpose.msra.mxu0 %v1062
        %1107 = vmatpush.xpose.msra.mxu0 %v1060
        %1108 = vmatmul.f32.gmra.mxu0 %v1028
        %v1109 = vpop.f32.mrf.mxu0
        %v1110 = vadd.f32 %v318, %v1109
        %1111 = vmatmul.f32.gmra.mxu0 %v1030
        %v1112 = vpop.f32.mrf.mxu0
        %v1113 = vadd.f32 %v319, %v1112
        %1114 = vmatmul.f32.gmra.mxu0 %v1032
        %v1115 = vpop.f32.mrf.mxu0
        %v1116 = vadd.f32 %v320, %v1115
        %1117 = vmatmul.f32.gmra.mxu0 %v1034
        %v1118 = vpop.f32.mrf.mxu0
        %v1119 = vadd.f32 %v321, %v1118
        %1120 = vmatmul.f32.gmra.mxu0 %v1036
        %v1121 = vpop.f32.mrf.mxu0
        %v1122 = vadd.f32 %v322, %v1121
        %1123 = vmatmul.f32.gmra.mxu0 %v1038
        %v1124 = vpop.f32.mrf.mxu0
        %v1125 = vadd.f32 %v323, %v1124
        %1126 = vmatmul.f32.gmra.mxu0 %v1040
        %v1127 = vpop.f32.mrf.mxu0
        %v1128 = vadd.f32 %v324, %v1127
        %1129 = vmatmul.f32.gmra.mxu0 %v1042
        %v1130 = vpop.f32.mrf.mxu0
        %v1131 = vadd.f32 %v325, %v1130
        %1132 = vmatmul.f32.gmra.mxu0 %v1044
        %v1133 = vpop.f32.mrf.mxu0
        %v1134 = vadd.f32 %v326, %v1133
        %1135 = vmatmul.f32.gmra.mxu0 %v1046
        %v1136 = vpop.f32.mrf.mxu0
        %v1137 = vadd.f32 %v327, %v1136
        %1138 = vmatmul.f32.gmra.mxu0 %v1048
        %v1139 = vpop.f32.mrf.mxu0
        %v1140 = vadd.f32 %v328, %v1139
        %1141 = vmatmul.f32.gmra.mxu0 %v1050
        %v1142 = vpop.f32.mrf.mxu0
        %v1143 = vadd.f32 %v329, %v1142
        %1144 = vmatmul.f32.gmra.mxu0 %v1052
        %v1145 = vpop.f32.mrf.mxu0
        %v1146 = vadd.f32 %v330, %v1145
        %1147 = vmatmul.f32.gmra.mxu0 %v1054
        %v1148 = vpop.f32.mrf.mxu0
        %v1149 = vadd.f32 %v331, %v1148
        %1150 = vmatmul.f32.gmra.mxu0 %v1056
        %v1151 = vpop.f32.mrf.mxu0
        %v1152 = vadd.f32 %v332, %v1151
        %1153 = vmatmul.f32.gmra.mxu0 %v1058
        %v1154 = vpop.f32.mrf.mxu0
        %v1155 = vadd.f32 %v333, %v1154
        %1156 = vdwg.mxu0
        %1157 = vmax.xlane.f32.xlu0 %v1110
        %v1158 = vpop.xlane.xlu0 %1157
        %1159 = vmax.xlane.f32.xlu0 %v1113
        %v1160 = vpop.xlane.xlu0 %1159
        %1161 = vmax.xlane.f32.xlu0 %v1116
        %v1162 = vpop.xlane.xlu0 %1161
        %1163 = vmax.xlane.f32.xlu0 %v1119
        %v1164 = vpop.xlane.xlu0 %1163
        %1165 = vmax.xlane.f32.xlu0 %v1122
        %v1166 = vpop.xlane.xlu0 %1165
        %1167 = vmax.xlane.f32.xlu0 %v1125
        %v1168 = vpop.xlane.xlu0 %1167
        %1169 = vmax.xlane.f32.xlu0 %v1128
        %v1170 = vpop.xlane.xlu0 %1169
        %1171 = vmax.xlane.f32.xlu0 %v1131
        %v1172 = vpop.xlane.xlu0 %1171
        %1173 = vmax.xlane.f32.xlu0 %v1134
        %v1174 = vpop.xlane.xlu0 %1173
        %1175 = vmax.xlane.f32.xlu0 %v1137
        %v1176 = vpop.xlane.xlu0 %1175
        %1177 = vmax.xlane.f32.xlu0 %v1140
        %v1178 = vpop.xlane.xlu0 %1177
        %1179 = vmax.xlane.f32.xlu0 %v1143
        %v1180 = vpop.xlane.xlu0 %1179
        %1181 = vmax.xlane.f32.xlu0 %v1146
        %v1182 = vpop.xlane.xlu0 %1181
        %1183 = vmax.xlane.f32.xlu0 %v1149
        %v1184 = vpop.xlane.xlu0 %1183
        %1185 = vmax.xlane.f32.xlu0 %v1152
        %v1186 = vpop.xlane.xlu0 %1185
        %1187 = vmax.xlane.f32.xlu0 %v1155
        %v1188 = vpop.xlane.xlu0 %1187
        %v1189 = vsub.f32 %v1110, %v1158
        %v1190 = vsub.f32 %v1113, %v1160
        %v1191 = vsub.f32 %v1116, %v1162
        %v1192 = vsub.f32 %v1119, %v1164
        %v1193 = vsub.f32 %v1122, %v1166
        %v1194 = vsub.f32 %v1125, %v1168
        %v1195 = vsub.f32 %v1128, %v1170
        %v1196 = vsub.f32 %v1131, %v1172
        %v1197 = vsub.f32 %v1134, %v1174
        %v1198 = vsub.f32 %v1137, %v1176
        %v1199 = vsub.f32 %v1140, %v1178
        %v1200 = vsub.f32 %v1143, %v1180
        %v1201 = vsub.f32 %v1146, %v1182
        %v1202 = vsub.f32 %v1149, %v1184
        %v1203 = vsub.f32 %v1152, %v1186
        %v1204 = vsub.f32 %v1155, %v1188
        %v1205 = vmul.f32 %v1189, 1.442695
        %v1206 = vpow.pop %v1205
        %v1207 = vmul.f32 %v1190, 1.442695
        %v1208 = vpow.pop %v1207
        %v1209 = vmul.f32 %v1191, 1.442695
        %v1210 = vpow.pop %v1209
        %v1211 = vmul.f32 %v1192, 1.442695
        %v1212 = vpow.pop %v1211
        %v1213 = vmul.f32 %v1193, 1.442695
        %v1214 = vpow.pop %v1213
        %v1215 = vmul.f32 %v1194, 1.442695
        %v1216 = vpow.pop %v1215
        %v1217 = vmul.f32 %v1195, 1.442695
        %v1218 = vpow.pop %v1217
        %v1219 = vmul.f32 %v1196, 1.442695
        %v1220 = vpow.pop %v1219
        %v1221 = vmul.f32 %v1197, 1.442695
        %v1222 = vpow.pop %v1221
        %v1223 = vmul.f32 %v1198, 1.442695
        %v1224 = vpow.pop %v1223
        %v1225 = vmul.f32 %v1199, 1.442695
        %v1226 = vpow.pop %v1225
        %v1227 = vmul.f32 %v1200, 1.442695
        %v1228 = vpow.pop %v1227
        %v1229 = vmul.f32 %v1201, 1.442695
        %v1230 = vpow.pop %v1229
        %v1231 = vmul.f32 %v1202, 1.442695
        %v1232 = vpow.pop %v1231
        %v1233 = vmul.f32 %v1203, 1.442695
        %v1234 = vpow.pop %v1233
        %v1235 = vmul.f32 %v1204, 1.442695
        %v1236 = vpow.pop %v1235
        %1237 = vadd.xlane.f32.xlu0 %v1206
        %v1238 = vpop.xlane.xlu0 %1237
        %1239 = vadd.xlane.f32.xlu0 %v1208
        %v1240 = vpop.xlane.xlu0 %1239
        %1241 = vadd.xlane.f32.xlu0 %v1210
        %v1242 = vpop.xlane.xlu0 %1241
        %1243 = vadd.xlane.f32.xlu0 %v1212
        %v1244 = vpop.xlane.xlu0 %1243
        %1245 = vadd.xlane.f32.xlu0 %v1214
        %v1246 = vpop.xlane.xlu0 %1245
        %1247 = vadd.xlane.f32.xlu0 %v1216
        %v1248 = vpop.xlane.xlu0 %1247
        %1249 = vadd.xlane.f32.xlu0 %v1218
        %v1250 = vpop.xlane.xlu0 %1249
        %1251 = vadd.xlane.f32.xlu0 %v1220
        %v1252 = vpop.xlane.xlu0 %1251
        %1253 = vadd.xlane.f32.xlu0 %v1222
        %v1254 = vpop.xlane.xlu0 %1253
        %1255 = vadd.xlane.f32.xlu0 %v1224
        %v1256 = vpop.xlane.xlu0 %1255
        %1257 = vadd.xlane.f32.xlu0 %v1226
        %v1258 = vpop.xlane.xlu0 %1257
        %1259 = vadd.xlane.f32.xlu0 %v1228
        %v1260 = vpop.xlane.xlu0 %1259
        %1261 = vadd.xlane.f32.xlu0 %v1230
        %v1262 = vpop.xlane.xlu0 %1261
        %1263 = vadd.xlane.f32.xlu0 %v1232
        %v1264 = vpop.xlane.xlu0 %1263
        %1265 = vadd.xlane.f32.xlu0 %v1234
        %v1266 = vpop.xlane.xlu0 %1265
        %1267 = vadd.xlane.f32.xlu0 %v1236
        %v1268 = vpop.xlane.xlu0 %1267
        %1285 = vrot.lane.b32.xlu0 %v530, 96
        %v1286 = vpop.permute.xlu0 %1285
        %1287 = vrot.lane.b32.xlu0 %v533, 96
        %v1288 = vpop.permute.xlu0 %1287
        %1289 = vrot.lane.b32.xlu0 %v536, 96
        %v1290 = vpop.permute.xlu0 %1289
        %1291 = vrot.lane.b32.xlu0 %v539, 96
        %v1292 = vpop.permute.xlu0 %1291
        %1293 = vrot.lane.b32.xlu0 %v542, 96
        %v1294 = vpop.permute.xlu0 %1293
        %1295 = vrot.lane.b32.xlu0 %v545, 96
        %v1296 = vpop.permute.xlu0 %1295
        %1297 = vrot.lane.b32.xlu0 %v548, 96
        %v1298 = vpop.permute.xlu0 %1297
        %1299 = vrot.lane.b32.xlu0 %v551, 96
        %v1300 = vpop.permute.xlu0 %1299
        %1301 = vrot.lane.b32.xlu0 %v554, 96
        %v1302 = vpop.permute.xlu0 %1301
        %1303 = vrot.lane.b32.xlu0 %v557, 96
        %v1304 = vpop.permute.xlu0 %1303
        %1305 = vrot.lane.b32.xlu0 %v560, 96
        %v1306 = vpop.permute.xlu0 %1305
        %1307 = vrot.lane.b32.xlu0 %v563, 96
        %v1308 = vpop.permute.xlu0 %1307
        %1309 = vrot.lane.b32.xlu0 %v566, 96
        %v1310 = vpop.permute.xlu0 %1309
        %1311 = vrot.lane.b32.xlu0 %v569, 96
        %v1312 = vpop.permute.xlu0 %1311
        %1313 = vrot.lane.b32.xlu0 %v572, 96
        %v1314 = vpop.permute.xlu0 %1313
        %1315 = vrot.lane.b32.xlu0 %v575, 96
        %v1316 = vpop.permute.xlu0 %1315
        %1333 = vmatpush.msra.mxu0 %v1316
        %1334 = vmatpush.msra.mxu0 %v1314
        %1335 = vmatpush.msra.mxu0 %v1312
        %1336 = vmatpush.msra.mxu0 %v1310
        %1337 = vmatpush.msra.mxu0 %v1308
        %1338 = vmatpush.msra.mxu0 %v1306
        %1339 = vmatpush.msra.mxu0 %v1304
        %1340 = vmatpush.msra.mxu0 %v1302
        %1341 = vmatpush.msra.mxu0 %v1300
        %1342 = vmatpush.msra.mxu0 %v1298
        %1343 = vmatpush.msra.mxu0 %v1296
        %1344 = vmatpush.msra.mxu0 %v1294
        %1345 = vmatpush.msra.mxu0 %v1292
        %1346 = vmatpush.msra.mxu0 %v1290
        %1347 = vmatpush.msra.mxu0 %v1288
        %1348 = vmatpush.msra.mxu0 %v1286
        %1349 = vmatmul.f32.gmra.mxu0 %v1206
        %v1350 = vpop.f32.mrf.mxu0
        %v1351 = vadd.f32 0.0, %v1350
        %1352 = vmatmul.f32.gmra.mxu0 %v1208
        %v1353 = vpop.f32.mrf.mxu0
        %v1354 = vadd.f32 0.0, %v1353
        %1355 = vmatmul.f32.gmra.mxu0 %v1210
        %v1356 = vpop.f32.mrf.mxu0
        %v1357 = vadd.f32 0.0, %v1356
        %1358 = vmatmul.f32.gmra.mxu0 %v1212
        %v1359 = vpop.f32.mrf.mxu0
        %v1360 = vadd.f32 0.0, %v1359
        %1361 = vmatmul.f32.gmra.mxu0 %v1214
        %v1362 = vpop.f32.mrf.mxu0
        %v1363 = vadd.f32 0.0, %v1362
        %1364 = vmatmul.f32.gmra.mxu0 %v1216
        %v1365 = vpop.f32.mrf.mxu0
        %v1366 = vadd.f32 0.0, %v1365
        %1367 = vmatmul.f32.gmra.mxu0 %v1218
        %v1368 = vpop.f32.mrf.mxu0
        %v1369 = vadd.f32 0.0, %v1368
        %1370 = vmatmul.f32.gmra.mxu0 %v1220
        %v1371 = vpop.f32.mrf.mxu0
        %v1372 = vadd.f32 0.0, %v1371
        %1373 = vmatmul.f32.gmra.mxu0 %v1222
        %v1374 = vpop.f32.mrf.mxu0
        %v1375 = vadd.f32 0.0, %v1374
        %1376 = vmatmul.f32.gmra.mxu0 %v1224
        %v1377 = vpop.f32.mrf.mxu0
        %v1378 = vadd.f32 0.0, %v1377
        %1379 = vmatmul.f32.gmra.mxu0 %v1226
        %v1380 = vpop.f32.mrf.mxu0
        %v1381 = vadd.f32 0.0, %v1380
        %1382 = vmatmul.f32.gmra.mxu0 %v1228
        %v1383 = vpop.f32.mrf.mxu0
        %v1384 = vadd.f32 0.0, %v1383
        %1385 = vmatmul.f32.gmra.mxu0 %v1230
        %v1386 = vpop.f32.mrf.mxu0
        %v1387 = vadd.f32 0.0, %v1386
        %1388 = vmatmul.f32.gmra.mxu0 %v1232
        %v1389 = vpop.f32.mrf.mxu0
        %v1390 = vadd.f32 0.0, %v1389
        %1391 = vmatmul.f32.gmra.mxu0 %v1234
        %v1392 = vpop.f32.mrf.mxu0
        %v1393 = vadd.f32 0.0, %v1392
        %1394 = vmatmul.f32.gmra.mxu0 %v1236
        %v1395 = vpop.f32.mrf.mxu0
        %v1396 = vadd.f32 0.0, %v1395
        %1397 = vdwg.mxu0
        %v1398 = vrcp.pop %v1238
        %v1399 = vrcp.pop %v1240
        %v1400 = vrcp.pop %v1242
        %v1401 = vrcp.pop %v1244
        %v1402 = vrcp.pop %v1246
        %v1403 = vrcp.pop %v1248
        %v1404 = vrcp.pop %v1250
        %v1405 = vrcp.pop %v1252
        %v1406 = vrcp.pop %v1254
        %v1407 = vrcp.pop %v1256
        %v1408 = vrcp.pop %v1258
        %v1409 = vrcp.pop %v1260
        %v1410 = vrcp.pop %v1262
        %v1411 = vrcp.pop %v1264
        %v1412 = vrcp.pop %v1266
        %v1413 = vrcp.pop %v1268
        %v1414 = vmul.f32 %v1351, %v1398
        %v1415 = vmul.f32 %v1354, %v1399
        %v1416 = vmul.f32 %v1357, %v1400
        %v1417 = vmul.f32 %v1360, %v1401
        %v1418 = vmul.f32 %v1363, %v1402
        %v1419 = vmul.f32 %v1366, %v1403
        %v1420 = vmul.f32 %v1369, %v1404
        %v1421 = vmul.f32 %v1372, %v1405
        %v1422 = vmul.f32 %v1375, %v1406
        %v1423 = vmul.f32 %v1378, %v1407
        %v1424 = vmul.f32 %v1381, %v1408
        %v1425 = vmul.f32 %v1384, %v1409
        %v1426 = vmul.f32 %v1387, %v1410
        %v1427 = vmul.f32 %v1390, %v1411
        %v1428 = vmul.f32 %v1393, %v1412
        %v1429 = vmul.f32 %v1396, %v1413
        %1446 = vrot.lane.b32.xlu0 %v1414, 32
        %v1447 = vpop.permute.xlu0 %1446
        %1448 = vrot.lane.b32.xlu0 %v1415, 32
        %v1449 = vpop.permute.xlu0 %1448
        %1450 = vrot.lane.b32.xlu0 %v1416, 32
        %v1451 = vpop.permute.xlu0 %1450
        %1452 = vrot.lane.b32.xlu0 %v1417, 32
        %v1453 = vpop.permute.xlu0 %1452
        %1454 = vrot.lane.b32.xlu0 %v1418, 32
        %v1455 = vpop.permute.xlu0 %1454
        %1456 = vrot.lane.b32.xlu0 %v1419, 32
        %v1457 = vpop.permute.xlu0 %1456
        %1458 = vrot.lane.b32.xlu0 %v1420, 32
        %v1459 = vpop.permute.xlu0 %1458
        %1460 = vrot.lane.b32.xlu0 %v1421, 32
        %v1461 = vpop.permute.xlu0 %1460
        %1462 = vrot.lane.b32.xlu0 %v1422, 32
        %v1463 = vpop.permute.xlu0 %1462
        %1464 = vrot.lane.b32.xlu0 %v1423, 32
        %v1465 = vpop.permute.xlu0 %1464
        %1466 = vrot.lane.b32.xlu0 %v1424, 32
        %v1467 = vpop.permute.xlu0 %1466
        %1468 = vrot.lane.b32.xlu0 %v1425, 32
        %v1469 = vpop.permute.xlu0 %1468
        %1470 = vrot.lane.b32.xlu0 %v1426, 32
        %v1471 = vpop.permute.xlu0 %1470
        %1472 = vrot.lane.b32.xlu0 %v1427, 32
        %v1473 = vpop.permute.xlu0 %1472
        %1474 = vrot.lane.b32.xlu0 %v1428, 32
        %v1475 = vpop.permute.xlu0 %1474
        %1476 = vrot.lane.b32.xlu0 %v1429, 32
        %v1477 = vpop.permute.xlu0 %1476
        %vm1494 = vcmask 523520
        %1495 = vst.msk [vmem:[#allocation2] sm:$0xff] %vm1494, %v1447
        %1496 = vst.msk [vmem:[#allocation2 + $0x8] sm:$0xff] %vm1494, %v1449
        %1497 = vst.msk [vmem:[#allocation2 + $0x10] sm:$0xff] %vm1494, %v1451
        %1498 = vst.msk [vmem:[#allocation2 + $0x18] sm:$0xff] %vm1494, %v1453
        %1499 = vst.msk [vmem:[#allocation2 + $0x20] sm:$0xff] %vm1494, %v1455
        %1500 = vst.msk [vmem:[#allocation2 + $0x28] sm:$0xff] %vm1494, %v1457
        %1501 = vst.msk [vmem:[#allocation2 + $0x30] sm:$0xff] %vm1494, %v1459
        %1502 = vst.msk [vmem:[#allocation2 + $0x38] sm:$0xff] %vm1494, %v1461
        %1503 = vst.msk [vmem:[#allocation2 + $0x40] sm:$0xff] %vm1494, %v1463
        %1504 = vst.msk [vmem:[#allocation2 + $0x48] sm:$0xff] %vm1494, %v1465
        %1505 = vst.msk [vmem:[#allocation2 + $0x50] sm:$0xff] %vm1494, %v1467
        %1506 = vst.msk [vmem:[#allocation2 + $0x58] sm:$0xff] %vm1494, %v1469
        %1507 = vst.msk [vmem:[#allocation2 + $0x60] sm:$0xff] %vm1494, %v1471
        %1508 = vst.msk [vmem:[#allocation2 + $0x68] sm:$0xff] %vm1494, %v1473
        %1509 = vst.msk [vmem:[#allocation2 + $0x70] sm:$0xff] %vm1494, %v1475
        %1510 = vst.msk [vmem:[#allocation2 + $0x78] sm:$0xff] %vm1494, %v1477
        %1511 = vrot.lane.b32.xlu0 %v368, 64
        %v1512 = vpop.permute.xlu0 %1511
        %1513 = vrot.lane.b32.xlu0 %v371, 64
        %v1514 = vpop.permute.xlu0 %1513
        %1515 = vrot.lane.b32.xlu0 %v374, 64
        %v1516 = vpop.permute.xlu0 %1515
        %1517 = vrot.lane.b32.xlu0 %v377, 64
        %v1518 = vpop.permute.xlu0 %1517
        %1519 = vrot.lane.b32.xlu0 %v380, 64
        %v1520 = vpop.permute.xlu0 %1519
        %1521 = vrot.lane.b32.xlu0 %v383, 64
        %v1522 = vpop.permute.xlu0 %1521
        %1523 = vrot.lane.b32.xlu0 %v386, 64
        %v1524 = vpop.permute.xlu0 %1523
        %1525 = vrot.lane.b32.xlu0 %v389, 64
        %v1526 = vpop.permute.xlu0 %1525
        %1527 = vrot.lane.b32.xlu0 %v392, 64
        %v1528 = vpop.permute.xlu0 %1527
        %1529 = vrot.lane.b32.xlu0 %v395, 64
        %v1530 = vpop.permute.xlu0 %1529
        %1531 = vrot.lane.b32.xlu0 %v398, 64
        %v1532 = vpop.permute.xlu0 %1531
        %1533 = vrot.lane.b32.xlu0 %v401, 64
        %v1534 = vpop.permute.xlu0 %1533
        %1535 = vrot.lane.b32.xlu0 %v404, 64
        %v1536 = vpop.permute.xlu0 %1535
        %1537 = vrot.lane.b32.xlu0 %v407, 64
        %v1538 = vpop.permute.xlu0 %1537
        %1539 = vrot.lane.b32.xlu0 %v410, 64
        %v1540 = vpop.permute.xlu0 %1539
        %1541 = vrot.lane.b32.xlu0 %v413, 64
        %v1542 = vpop.permute.xlu0 %1541
        %1543 = vrot.lane.b32.xlu0 %v449, 64
        %v1544 = vpop.permute.xlu0 %1543
        %1545 = vrot.lane.b32.xlu0 %v452, 64
        %v1546 = vpop.permute.xlu0 %1545
        %1547 = vrot.lane.b32.xlu0 %v455, 64
        %v1548 = vpop.permute.xlu0 %1547
        %1549 = vrot.lane.b32.xlu0 %v458, 64
        %v1550 = vpop.permute.xlu0 %1549
        %1551 = vrot.lane.b32.xlu0 %v461, 64
        %v1552 = vpop.permute.xlu0 %1551
        %1553 = vrot.lane.b32.xlu0 %v464, 64
        %v1554 = vpop.permute.xlu0 %1553
        %1555 = vrot.lane.b32.xlu0 %v467, 64
        %v1556 = vpop.permute.xlu0 %1555
        %1557 = vrot.lane.b32.xlu0 %v470, 64
        %v1558 = vpop.permute.xlu0 %1557
        %1559 = vrot.lane.b32.xlu0 %v473, 64
        %v1560 = vpop.permute.xlu0 %1559
        %1561 = vrot.lane.b32.xlu0 %v476, 64
        %v1562 = vpop.permute.xlu0 %1561
        %1563 = vrot.lane.b32.xlu0 %v479, 64
        %v1564 = vpop.permute.xlu0 %1563
        %1565 = vrot.lane.b32.xlu0 %v482, 64
        %v1566 = vpop.permute.xlu0 %1565
        %1567 = vrot.lane.b32.xlu0 %v485, 64
        %v1568 = vpop.permute.xlu0 %1567
        %1569 = vrot.lane.b32.xlu0 %v488, 64
        %v1570 = vpop.permute.xlu0 %1569
        %1571 = vrot.lane.b32.xlu0 %v491, 64
        %v1572 = vpop.permute.xlu0 %1571
        %1573 = vrot.lane.b32.xlu0 %v494, 64
        %v1574 = vpop.permute.xlu0 %1573
        %v1575 = vsel %vm577, %v1512, 0
        %v1577 = vsel %vm577, %v1514, 0
        %v1579 = vsel %vm577, %v1516, 0
        %v1581 = vsel %vm577, %v1518, 0
        %v1583 = vsel %vm577, %v1520, 0
        %v1585 = vsel %vm577, %v1522, 0
        %v1587 = vsel %vm577, %v1524, 0
        %v1589 = vsel %vm577, %v1526, 0
        %v1591 = vsel %vm577, %v1528, 0
        %v1593 = vsel %vm577, %v1530, 0
        %v1595 = vsel %vm577, %v1532, 0
        %v1597 = vsel %vm577, %v1534, 0
        %v1599 = vsel %vm577, %v1536, 0
        %v1601 = vsel %vm577, %v1538, 0
        %v1603 = vsel %vm577, %v1540, 0
        %v1605 = vsel %vm577, %v1542, 0
        %v1607 = vsel %vm577, %v1544, 0
        %v1609 = vsel %vm577, %v1546, 0
        %v1611 = vsel %vm577, %v1548, 0
        %v1613 = vsel %vm577, %v1550, 0
        %v1615 = vsel %vm577, %v1552, 0
        %v1617 = vsel %vm577, %v1554, 0
        %v1619 = vsel %vm577, %v1556, 0
        %v1621 = vsel %vm577, %v1558, 0
        %v1623 = vsel %vm577, %v1560, 0
        %v1625 = vsel %vm577, %v1562, 0
        %v1627 = vsel %vm577, %v1564, 0
        %v1629 = vsel %vm577, %v1566, 0
        %v1631 = vsel %vm577, %v1568, 0
        %v1633 = vsel %vm577, %v1570, 0
        %v1635 = vsel %vm577, %v1572, 0
        %v1637 = vsel %vm577, %v1574, 0
        %1639 = vmatpush.xpose.msra.mxu0 %v1637
        %1640 = vmatpush.xpose.msra.mxu0 %v1635
        %1641 = vmatpush.xpose.msra.mxu0 %v1633
        %1642 = vmatpush.xpose.msra.mxu0 %v1631
        %1643 = vmatpush.xpose.msra.mxu0 %v1629
        %1644 = vmatpush.xpose.msra.mxu0 %v1627
        %1645 = vmatpush.xpose.msra.mxu0 %v1625
        %1646 = vmatpush.xpose.msra.mxu0 %v1623
        %1647 = vmatpush.xpose.msra.mxu0 %v1621
        %1648 = vmatpush.xpose.msra.mxu0 %v1619
        %1649 = vmatpush.xpose.msra.mxu0 %v1617
        %1650 = vmatpush.xpose.msra.mxu0 %v1615
        %1651 = vmatpush.xpose.msra.mxu0 %v1613
        %1652 = vmatpush.xpose.msra.mxu0 %v1611
        %1653 = vmatpush.xpose.msra.mxu0 %v1609
        %1654 = vmatpush.xpose.msra.mxu0 %v1607
        %1655 = vmatmul.f32.gmra.mxu0 %v1575
        %v1656 = vpop.f32.mrf.mxu0
        %v1657 = vadd.f32 %v318, %v1656
        %1658 = vmatmul.f32.gmra.mxu0 %v1577
        %v1659 = vpop.f32.mrf.mxu0
        %v1660 = vadd.f32 %v319, %v1659
        %1661 = vmatmul.f32.gmra.mxu0 %v1579
        %v1662 = vpop.f32.mrf.mxu0
        %v1663 = vadd.f32 %v320, %v1662
        %1664 = vmatmul.f32.gmra.mxu0 %v1581
        %v1665 = vpop.f32.mrf.mxu0
        %v1666 = vadd.f32 %v321, %v1665
        %1667 = vmatmul.f32.gmra.mxu0 %v1583
        %v1668 = vpop.f32.mrf.mxu0
        %v1669 = vadd.f32 %v322, %v1668
        %1670 = vmatmul.f32.gmra.mxu0 %v1585
        %v1671 = vpop.f32.mrf.mxu0
        %v1672 = vadd.f32 %v323, %v1671
        %1673 = vmatmul.f32.gmra.mxu0 %v1587
        %v1674 = vpop.f32.mrf.mxu0
        %v1675 = vadd.f32 %v324, %v1674
        %1676 = vmatmul.f32.gmra.mxu0 %v1589
        %v1677 = vpop.f32.mrf.mxu0
        %v1678 = vadd.f32 %v325, %v1677
        %1679 = vmatmul.f32.gmra.mxu0 %v1591
        %v1680 = vpop.f32.mrf.mxu0
        %v1681 = vadd.f32 %v326, %v1680
        %1682 = vmatmul.f32.gmra.mxu0 %v1593
        %v1683 = vpop.f32.mrf.mxu0
        %v1684 = vadd.f32 %v327, %v1683
        %1685 = vmatmul.f32.gmra.mxu0 %v1595
        %v1686 = vpop.f32.mrf.mxu0
        %v1687 = vadd.f32 %v328, %v1686
        %1688 = vmatmul.f32.gmra.mxu0 %v1597
        %v1689 = vpop.f32.mrf.mxu0
        %v1690 = vadd.f32 %v329, %v1689
        %1691 = vmatmul.f32.gmra.mxu0 %v1599
        %v1692 = vpop.f32.mrf.mxu0
        %v1693 = vadd.f32 %v330, %v1692
        %1694 = vmatmul.f32.gmra.mxu0 %v1601
        %v1695 = vpop.f32.mrf.mxu0
        %v1696 = vadd.f32 %v331, %v1695
        %1697 = vmatmul.f32.gmra.mxu0 %v1603
        %v1698 = vpop.f32.mrf.mxu0
        %v1699 = vadd.f32 %v332, %v1698
        %1700 = vmatmul.f32.gmra.mxu0 %v1605
        %v1701 = vpop.f32.mrf.mxu0
        %v1702 = vadd.f32 %v333, %v1701
        %1703 = vdwg.mxu0
        %1704 = vmax.xlane.f32.xlu0 %v1657
        %v1705 = vpop.xlane.xlu0 %1704
        %1706 = vmax.xlane.f32.xlu0 %v1660
        %v1707 = vpop.xlane.xlu0 %1706
        %1708 = vmax.xlane.f32.xlu0 %v1663
        %v1709 = vpop.xlane.xlu0 %1708
        %1710 = vmax.xlane.f32.xlu0 %v1666
        %v1711 = vpop.xlane.xlu0 %1710
        %1712 = vmax.xlane.f32.xlu0 %v1669
        %v1713 = vpop.xlane.xlu0 %1712
        %1714 = vmax.xlane.f32.xlu0 %v1672
        %v1715 = vpop.xlane.xlu0 %1714
        %1716 = vmax.xlane.f32.xlu0 %v1675
        %v1717 = vpop.xlane.xlu0 %1716
        %1718 = vmax.xlane.f32.xlu0 %v1678
        %v1719 = vpop.xlane.xlu0 %1718
        %1720 = vmax.xlane.f32.xlu0 %v1681
        %v1721 = vpop.xlane.xlu0 %1720
        %1722 = vmax.xlane.f32.xlu0 %v1684
        %v1723 = vpop.xlane.xlu0 %1722
        %1724 = vmax.xlane.f32.xlu0 %v1687
        %v1725 = vpop.xlane.xlu0 %1724
        %1726 = vmax.xlane.f32.xlu0 %v1690
        %v1727 = vpop.xlane.xlu0 %1726
        %1728 = vmax.xlane.f32.xlu0 %v1693
        %v1729 = vpop.xlane.xlu0 %1728
        %1730 = vmax.xlane.f32.xlu0 %v1696
        %v1731 = vpop.xlane.xlu0 %1730
        %1732 = vmax.xlane.f32.xlu0 %v1699
        %v1733 = vpop.xlane.xlu0 %1732
        %1734 = vmax.xlane.f32.xlu0 %v1702
        %v1735 = vpop.xlane.xlu0 %1734
        %v1736 = vsub.f32 %v1657, %v1705
        %v1737 = vsub.f32 %v1660, %v1707
        %v1738 = vsub.f32 %v1663, %v1709
        %v1739 = vsub.f32 %v1666, %v1711
        %v1740 = vsub.f32 %v1669, %v1713
        %v1741 = vsub.f32 %v1672, %v1715
        %v1742 = vsub.f32 %v1675, %v1717
        %v1743 = vsub.f32 %v1678, %v1719
        %v1744 = vsub.f32 %v1681, %v1721
        %v1745 = vsub.f32 %v1684, %v1723
        %v1746 = vsub.f32 %v1687, %v1725
        %v1747 = vsub.f32 %v1690, %v1727
        %v1748 = vsub.f32 %v1693, %v1729
        %v1749 = vsub.f32 %v1696, %v1731
        %v1750 = vsub.f32 %v1699, %v1733
        %v1751 = vsub.f32 %v1702, %v1735
        %v1752 = vmul.f32 %v1736, 1.442695
        %v1753 = vpow.pop %v1752
        %v1754 = vmul.f32 %v1737, 1.442695
        %v1755 = vpow.pop %v1754
        %v1756 = vmul.f32 %v1738, 1.442695
        %v1757 = vpow.pop %v1756
        %v1758 = vmul.f32 %v1739, 1.442695
        %v1759 = vpow.pop %v1758
        %v1760 = vmul.f32 %v1740, 1.442695
        %v1761 = vpow.pop %v1760
        %v1762 = vmul.f32 %v1741, 1.442695
        %v1763 = vpow.pop %v1762
        %v1764 = vmul.f32 %v1742, 1.442695
        %v1765 = vpow.pop %v1764
        %v1766 = vmul.f32 %v1743, 1.442695
        %v1767 = vpow.pop %v1766
        %v1768 = vmul.f32 %v1744, 1.442695
        %v1769 = vpow.pop %v1768
        %v1770 = vmul.f32 %v1745, 1.442695
        %v1771 = vpow.pop %v1770
        %v1772 = vmul.f32 %v1746, 1.442695
        %v1773 = vpow.pop %v1772
        %v1774 = vmul.f32 %v1747, 1.442695
        %v1775 = vpow.pop %v1774
        %v1776 = vmul.f32 %v1748, 1.442695
        %v1777 = vpow.pop %v1776
        %v1778 = vmul.f32 %v1749, 1.442695
        %v1779 = vpow.pop %v1778
        %v1780 = vmul.f32 %v1750, 1.442695
        %v1781 = vpow.pop %v1780
        %v1782 = vmul.f32 %v1751, 1.442695
        %v1783 = vpow.pop %v1782
        %1784 = vadd.xlane.f32.xlu0 %v1753
        %v1785 = vpop.xlane.xlu0 %1784
        %1786 = vadd.xlane.f32.xlu0 %v1755
        %v1787 = vpop.xlane.xlu0 %1786
        %1788 = vadd.xlane.f32.xlu0 %v1757
        %v1789 = vpop.xlane.xlu0 %1788
        %1790 = vadd.xlane.f32.xlu0 %v1759
        %v1791 = vpop.xlane.xlu0 %1790
        %1792 = vadd.xlane.f32.xlu0 %v1761
        %v1793 = vpop.xlane.xlu0 %1792
        %1794 = vadd.xlane.f32.xlu0 %v1763
        %v1795 = vpop.xlane.xlu0 %1794
        %1796 = vadd.xlane.f32.xlu0 %v1765
        %v1797 = vpop.xlane.xlu0 %1796
        %1798 = vadd.xlane.f32.xlu0 %v1767
        %v1799 = vpop.xlane.xlu0 %1798
        %1800 = vadd.xlane.f32.xlu0 %v1769
        %v1801 = vpop.xlane.xlu0 %1800
        %1802 = vadd.xlane.f32.xlu0 %v1771
        %v1803 = vpop.xlane.xlu0 %1802
        %1804 = vadd.xlane.f32.xlu0 %v1773
        %v1805 = vpop.xlane.xlu0 %1804
        %1806 = vadd.xlane.f32.xlu0 %v1775
        %v1807 = vpop.xlane.xlu0 %1806
        %1808 = vadd.xlane.f32.xlu0 %v1777
        %v1809 = vpop.xlane.xlu0 %1808
        %1810 = vadd.xlane.f32.xlu0 %v1779
        %v1811 = vpop.xlane.xlu0 %1810
        %1812 = vadd.xlane.f32.xlu0 %v1781
        %v1813 = vpop.xlane.xlu0 %1812
        %1814 = vadd.xlane.f32.xlu0 %v1783
        %v1815 = vpop.xlane.xlu0 %1814
        %1816 = vrot.lane.b32.xlu0 %v530, 64
        %v1817 = vpop.permute.xlu0 %1816
        %1818 = vrot.lane.b32.xlu0 %v533, 64
        %v1819 = vpop.permute.xlu0 %1818
        %1820 = vrot.lane.b32.xlu0 %v536, 64
        %v1821 = vpop.permute.xlu0 %1820
        %1822 = vrot.lane.b32.xlu0 %v539, 64
        %v1823 = vpop.permute.xlu0 %1822
        %1824 = vrot.lane.b32.xlu0 %v542, 64
        %v1825 = vpop.permute.xlu0 %1824
        %1826 = vrot.lane.b32.xlu0 %v545, 64
        %v1827 = vpop.permute.xlu0 %1826
        %1828 = vrot.lane.b32.xlu0 %v548, 64
        %v1829 = vpop.permute.xlu0 %1828
        %1830 = vrot.lane.b32.xlu0 %v551, 64
        %v1831 = vpop.permute.xlu0 %1830
        %1832 = vrot.lane.b32.xlu0 %v554, 64
        %v1833 = vpop.permute.xlu0 %1832
        %1834 = vrot.lane.b32.xlu0 %v557, 64
        %v1835 = vpop.permute.xlu0 %1834
        %1836 = vrot.lane.b32.xlu0 %v560, 64
        %v1837 = vpop.permute.xlu0 %1836
        %1838 = vrot.lane.b32.xlu0 %v563, 64
        %v1839 = vpop.permute.xlu0 %1838
        %1840 = vrot.lane.b32.xlu0 %v566, 64
        %v1841 = vpop.permute.xlu0 %1840
        %1842 = vrot.lane.b32.xlu0 %v569, 64
        %v1843 = vpop.permute.xlu0 %1842
        %1844 = vrot.lane.b32.xlu0 %v572, 64
        %v1845 = vpop.permute.xlu0 %1844
        %1846 = vrot.lane.b32.xlu0 %v575, 64
        %v1847 = vpop.permute.xlu0 %1846
        %1864 = vmatpush.msra.mxu0 %v1847
        %1865 = vmatpush.msra.mxu0 %v1845
        %1866 = vmatpush.msra.mxu0 %v1843
        %1867 = vmatpush.msra.mxu0 %v1841
        %1868 = vmatpush.msra.mxu0 %v1839
        %1869 = vmatpush.msra.mxu0 %v1837
        %1870 = vmatpush.msra.mxu0 %v1835
        %1871 = vmatpush.msra.mxu0 %v1833
        %1872 = vmatpush.msra.mxu0 %v1831
        %1873 = vmatpush.msra.mxu0 %v1829
        %1874 = vmatpush.msra.mxu0 %v1827
        %1875 = vmatpush.msra.mxu0 %v1825
        %1876 = vmatpush.msra.mxu0 %v1823
        %1877 = vmatpush.msra.mxu0 %v1821
        %1878 = vmatpush.msra.mxu0 %v1819
        %1879 = vmatpush.msra.mxu0 %v1817
        %1880 = vmatmul.f32.gmra.mxu0 %v1753
        %v1881 = vpop.f32.mrf.mxu0
        %v1882 = vadd.f32 0.0, %v1881
        %1883 = vmatmul.f32.gmra.mxu0 %v1755
        %v1884 = vpop.f32.mrf.mxu0
        %v1885 = vadd.f32 0.0, %v1884
        %1886 = vmatmul.f32.gmra.mxu0 %v1757
        %v1887 = vpop.f32.mrf.mxu0
        %v1888 = vadd.f32 0.0, %v1887
        %1889 = vmatmul.f32.gmra.mxu0 %v1759
        %v1890 = vpop.f32.mrf.mxu0
        %v1891 = vadd.f32 0.0, %v1890
        %1892 = vmatmul.f32.gmra.mxu0 %v1761
        %v1893 = vpop.f32.mrf.mxu0
        %v1894 = vadd.f32 0.0, %v1893
        %1895 = vmatmul.f32.gmra.mxu0 %v1763
        %v1896 = vpop.f32.mrf.mxu0
        %v1897 = vadd.f32 0.0, %v1896
        %1898 = vmatmul.f32.gmra.mxu0 %v1765
        %v1899 = vpop.f32.mrf.mxu0
        %v1900 = vadd.f32 0.0, %v1899
        %1901 = vmatmul.f32.gmra.mxu0 %v1767
        %v1902 = vpop.f32.mrf.mxu0
        %v1903 = vadd.f32 0.0, %v1902
        %1904 = vmatmul.f32.gmra.mxu0 %v1769
        %v1905 = vpop.f32.mrf.mxu0
        %v1906 = vadd.f32 0.0, %v1905
        %1907 = vmatmul.f32.gmra.mxu0 %v1771
        %v1908 = vpop.f32.mrf.mxu0
        %v1909 = vadd.f32 0.0, %v1908
        %1910 = vmatmul.f32.gmra.mxu0 %v1773
        %v1911 = vpop.f32.mrf.mxu0
        %v1912 = vadd.f32 0.0, %v1911
        %1913 = vmatmul.f32.gmra.mxu0 %v1775
        %v1914 = vpop.f32.mrf.mxu0
        %v1915 = vadd.f32 0.0, %v1914
        %1916 = vmatmul.f32.gmra.mxu0 %v1777
        %v1917 = vpop.f32.mrf.mxu0
        %v1918 = vadd.f32 0.0, %v1917
        %1919 = vmatmul.f32.gmra.mxu0 %v1779
        %v1920 = vpop.f32.mrf.mxu0
        %v1921 = vadd.f32 0.0, %v1920
        %1922 = vmatmul.f32.gmra.mxu0 %v1781
        %v1923 = vpop.f32.mrf.mxu0
        %v1924 = vadd.f32 0.0, %v1923
        %1925 = vmatmul.f32.gmra.mxu0 %v1783
        %v1926 = vpop.f32.mrf.mxu0
        %v1927 = vadd.f32 0.0, %v1926
        %1928 = vdwg.mxu0
        %v1929 = vrcp.pop %v1785
        %v1930 = vrcp.pop %v1787
        %v1931 = vrcp.pop %v1789
        %v1932 = vrcp.pop %v1791
        %v1933 = vrcp.pop %v1793
        %v1934 = vrcp.pop %v1795
        %v1935 = vrcp.pop %v1797
        %v1936 = vrcp.pop %v1799
        %v1937 = vrcp.pop %v1801
        %v1938 = vrcp.pop %v1803
        %v1939 = vrcp.pop %v1805
        %v1940 = vrcp.pop %v1807
        %v1941 = vrcp.pop %v1809
        %v1942 = vrcp.pop %v1811
        %v1943 = vrcp.pop %v1813
        %v1944 = vrcp.pop %v1815
        %v1945 = vmul.f32 %v1882, %v1929
        %v1946 = vmul.f32 %v1885, %v1930
        %v1947 = vmul.f32 %v1888, %v1931
        %v1948 = vmul.f32 %v1891, %v1932
        %v1949 = vmul.f32 %v1894, %v1933
        %v1950 = vmul.f32 %v1897, %v1934
        %v1951 = vmul.f32 %v1900, %v1935
        %v1952 = vmul.f32 %v1903, %v1936
        %v1953 = vmul.f32 %v1906, %v1937
        %v1954 = vmul.f32 %v1909, %v1938
        %v1955 = vmul.f32 %v1912, %v1939
        %v1956 = vmul.f32 %v1915, %v1940
        %v1957 = vmul.f32 %v1918, %v1941
        %v1958 = vmul.f32 %v1921, %v1942
        %v1959 = vmul.f32 %v1924, %v1943
        %v1960 = vmul.f32 %v1927, %v1944
        %1977 = vrot.lane.b32.xlu0 %v1945, 64
        %v1978 = vpop.permute.xlu0 %1977
        %1979 = vrot.lane.b32.xlu0 %v1946, 64
        %v1980 = vpop.permute.xlu0 %1979
        %1981 = vrot.lane.b32.xlu0 %v1947, 64
        %v1982 = vpop.permute.xlu0 %1981
        %1983 = vrot.lane.b32.xlu0 %v1948, 64
        %v1984 = vpop.permute.xlu0 %1983
        %1985 = vrot.lane.b32.xlu0 %v1949, 64
        %v1986 = vpop.permute.xlu0 %1985
        %1987 = vrot.lane.b32.xlu0 %v1950, 64
        %v1988 = vpop.permute.xlu0 %1987
        %1989 = vrot.lane.b32.xlu0 %v1951, 64
        %v1990 = vpop.permute.xlu0 %1989
        %1991 = vrot.lane.b32.xlu0 %v1952, 64
        %v1992 = vpop.permute.xlu0 %1991
        %1993 = vrot.lane.b32.xlu0 %v1953, 64
        %v1994 = vpop.permute.xlu0 %1993
        %1995 = vrot.lane.b32.xlu0 %v1954, 64
        %v1996 = vpop.permute.xlu0 %1995
        %1997 = vrot.lane.b32.xlu0 %v1955, 64
        %v1998 = vpop.permute.xlu0 %1997
        %1999 = vrot.lane.b32.xlu0 %v1956, 64
        %v2000 = vpop.permute.xlu0 %1999
        %2001 = vrot.lane.b32.xlu0 %v1957, 64
        %v2002 = vpop.permute.xlu0 %2001
        %2003 = vrot.lane.b32.xlu0 %v1958, 64
        %v2004 = vpop.permute.xlu0 %2003
        %2005 = vrot.lane.b32.xlu0 %v1959, 64
        %v2006 = vpop.permute.xlu0 %2005
        %2007 = vrot.lane.b32.xlu0 %v1960, 64
        %v2008 = vpop.permute.xlu0 %2007
        %vm2025 = vcmask 785920
        %2026 = vst.msk [vmem:[#allocation2] sm:$0xff] %vm2025, %v1978
        %2027 = vst.msk [vmem:[#allocation2 + $0x8] sm:$0xff] %vm2025, %v1980
        %2028 = vst.msk [vmem:[#allocation2 + $0x10] sm:$0xff] %vm2025, %v1982
        %2029 = vst.msk [vmem:[#allocation2 + $0x18] sm:$0xff] %vm2025, %v1984
        %2030 = vst.msk [vmem:[#allocation2 + $0x20] sm:$0xff] %vm2025, %v1986
        %2031 = vst.msk [vmem:[#allocation2 + $0x28] sm:$0xff] %vm2025, %v1988
        %2032 = vst.msk [vmem:[#allocation2 + $0x30] sm:$0xff] %vm2025, %v1990
        %2033 = vst.msk [vmem:[#allocation2 + $0x38] sm:$0xff] %vm2025, %v1992
        %2034 = vst.msk [vmem:[#allocation2 + $0x40] sm:$0xff] %vm2025, %v1994
        %2035 = vst.msk [vmem:[#allocation2 + $0x48] sm:$0xff] %vm2025, %v1996
        %2036 = vst.msk [vmem:[#allocation2 + $0x50] sm:$0xff] %vm2025, %v1998
        %2037 = vst.msk [vmem:[#allocation2 + $0x58] sm:$0xff] %vm2025, %v2000
        %2038 = vst.msk [vmem:[#allocation2 + $0x60] sm:$0xff] %vm2025, %v2002
        %2039 = vst.msk [vmem:[#allocation2 + $0x68] sm:$0xff] %vm2025, %v2004
        %2040 = vst.msk [vmem:[#allocation2 + $0x70] sm:$0xff] %vm2025, %v2006
        %2041 = vst.msk [vmem:[#allocation2 + $0x78] sm:$0xff] %vm2025, %v2008
        %2042 = vrot.lane.b32.xlu0 %v368, 32
        %v2043 = vpop.permute.xlu0 %2042
        %2044 = vrot.lane.b32.xlu0 %v371, 32
        %v2045 = vpop.permute.xlu0 %2044
        %2046 = vrot.lane.b32.xlu0 %v374, 32
        %v2047 = vpop.permute.xlu0 %2046
        %2048 = vrot.lane.b32.xlu0 %v377, 32
        %v2049 = vpop.permute.xlu0 %2048
        %2050 = vrot.lane.b32.xlu0 %v380, 32
        %v2051 = vpop.permute.xlu0 %2050
        %2052 = vrot.lane.b32.xlu0 %v383, 32
        %v2053 = vpop.permute.xlu0 %2052
        %2054 = vrot.lane.b32.xlu0 %v386, 32
        %v2055 = vpop.permute.xlu0 %2054
        %2056 = vrot.lane.b32.xlu0 %v389, 32
        %v2057 = vpop.permute.xlu0 %2056
        %2058 = vrot.lane.b32.xlu0 %v392, 32
        %v2059 = vpop.permute.xlu0 %2058
        %2060 = vrot.lane.b32.xlu0 %v395, 32
        %v2061 = vpop.permute.xlu0 %2060
        %2062 = vrot.lane.b32.xlu0 %v398, 32
        %v2063 = vpop.permute.xlu0 %2062
        %2064 = vrot.lane.b32.xlu0 %v401, 32
        %v2065 = vpop.permute.xlu0 %2064
        %2066 = vrot.lane.b32.xlu0 %v404, 32
        %v2067 = vpop.permute.xlu0 %2066
        %2068 = vrot.lane.b32.xlu0 %v407, 32
        %v2069 = vpop.permute.xlu0 %2068
        %2070 = vrot.lane.b32.xlu0 %v410, 32
        %v2071 = vpop.permute.xlu0 %2070
        %2072 = vrot.lane.b32.xlu0 %v413, 32
        %v2073 = vpop.permute.xlu0 %2072
        %2074 = vrot.lane.b32.xlu0 %v449, 32
        %v2075 = vpop.permute.xlu0 %2074
        %2076 = vrot.lane.b32.xlu0 %v452, 32
        %v2077 = vpop.permute.xlu0 %2076
        %2078 = vrot.lane.b32.xlu0 %v455, 32
        %v2079 = vpop.permute.xlu0 %2078
        %2080 = vrot.lane.b32.xlu0 %v458, 32
        %v2081 = vpop.permute.xlu0 %2080
        %2082 = vrot.lane.b32.xlu0 %v461, 32
        %v2083 = vpop.permute.xlu0 %2082
        %2084 = vrot.lane.b32.xlu0 %v464, 32
        %v2085 = vpop.permute.xlu0 %2084
        %2086 = vrot.lane.b32.xlu0 %v467, 32
        %v2087 = vpop.permute.xlu0 %2086
        %2088 = vrot.lane.b32.xlu0 %v470, 32
        %v2089 = vpop.permute.xlu0 %2088
        %2090 = vrot.lane.b32.xlu0 %v473, 32
        %v2091 = vpop.permute.xlu0 %2090
        %2092 = vrot.lane.b32.xlu0 %v476, 32
        %v2093 = vpop.permute.xlu0 %2092
        %2094 = vrot.lane.b32.xlu0 %v479, 32
        %v2095 = vpop.permute.xlu0 %2094
        %2096 = vrot.lane.b32.xlu0 %v482, 32
        %v2097 = vpop.permute.xlu0 %2096
        %2098 = vrot.lane.b32.xlu0 %v485, 32
        %v2099 = vpop.permute.xlu0 %2098
        %2100 = vrot.lane.b32.xlu0 %v488, 32
        %v2101 = vpop.permute.xlu0 %2100
        %2102 = vrot.lane.b32.xlu0 %v491, 32
        %v2103 = vpop.permute.xlu0 %2102
        %2104 = vrot.lane.b32.xlu0 %v494, 32
        %v2105 = vpop.permute.xlu0 %2104
        %v2106 = vsel %vm577, %v2043, 0
        %v2108 = vsel %vm577, %v2045, 0
        %v2110 = vsel %vm577, %v2047, 0
        %v2112 = vsel %vm577, %v2049, 0
        %v2114 = vsel %vm577, %v2051, 0
        %v2116 = vsel %vm577, %v2053, 0
        %v2118 = vsel %vm577, %v2055, 0
        %v2120 = vsel %vm577, %v2057, 0
        %v2122 = vsel %vm577, %v2059, 0
        %v2124 = vsel %vm577, %v2061, 0
        %v2126 = vsel %vm577, %v2063, 0
        %v2128 = vsel %vm577, %v2065, 0
        %v2130 = vsel %vm577, %v2067, 0
        %v2132 = vsel %vm577, %v2069, 0
        %v2134 = vsel %vm577, %v2071, 0
        %v2136 = vsel %vm577, %v2073, 0
        %v2138 = vsel %vm577, %v2075, 0
        %v2140 = vsel %vm577, %v2077, 0
        %v2142 = vsel %vm577, %v2079, 0
        %v2144 = vsel %vm577, %v2081, 0
        %v2146 = vsel %vm577, %v2083, 0
        %v2148 = vsel %vm577, %v2085, 0
        %v2150 = vsel %vm577, %v2087, 0
        %v2152 = vsel %vm577, %v2089, 0
        %v2154 = vsel %vm577, %v2091, 0
        %v2156 = vsel %vm577, %v2093, 0
        %v2158 = vsel %vm577, %v2095, 0
        %v2160 = vsel %vm577, %v2097, 0
        %v2162 = vsel %vm577, %v2099, 0
        %v2164 = vsel %vm577, %v2101, 0
        %v2166 = vsel %vm577, %v2103, 0
        %v2168 = vsel %vm577, %v2105, 0
        %2170 = vmatpush.xpose.msra.mxu0 %v2168
        %2171 = vmatpush.xpose.msra.mxu0 %v2166
        %2172 = vmatpush.xpose.msra.mxu0 %v2164
        %2173 = vmatpush.xpose.msra.mxu0 %v2162
        %2174 = vmatpush.xpose.msra.mxu0 %v2160
        %2175 = vmatpush.xpose.msra.mxu0 %v2158
        %2176 = vmatpush.xpose.msra.mxu0 %v2156
        %2177 = vmatpush.xpose.msra.mxu0 %v2154
        %2178 = vmatpush.xpose.msra.mxu0 %v2152
        %2179 = vmatpush.xpose.msra.mxu0 %v2150
        %2180 = vmatpush.xpose.msra.mxu0 %v2148
        %2181 = vmatpush.xpose.msra.mxu0 %v2146
        %2182 = vmatpush.xpose.msra.mxu0 %v2144
        %2183 = vmatpush.xpose.msra.mxu0 %v2142
        %2184 = vmatpush.xpose.msra.mxu0 %v2140
        %2185 = vmatpush.xpose.msra.mxu0 %v2138
        %2186 = vmatmul.f32.gmra.mxu0 %v2106
        %v2187 = vpop.f32.mrf.mxu0
        %v2188 = vadd.f32 %v318, %v2187
        %2189 = vmatmul.f32.gmra.mxu0 %v2108
        %v2190 = vpop.f32.mrf.mxu0
        %v2191 = vadd.f32 %v319, %v2190
        %2192 = vmatmul.f32.gmra.mxu0 %v2110
        %v2193 = vpop.f32.mrf.mxu0
        %v2194 = vadd.f32 %v320, %v2193
        %2195 = vmatmul.f32.gmra.mxu0 %v2112
        %v2196 = vpop.f32.mrf.mxu0
        %v2197 = vadd.f32 %v321, %v2196
        %2198 = vmatmul.f32.gmra.mxu0 %v2114
        %v2199 = vpop.f32.mrf.mxu0
        %v2200 = vadd.f32 %v322, %v2199
        %2201 = vmatmul.f32.gmra.mxu0 %v2116
        %v2202 = vpop.f32.mrf.mxu0
        %v2203 = vadd.f32 %v323, %v2202
        %2204 = vmatmul.f32.gmra.mxu0 %v2118
        %v2205 = vpop.f32.mrf.mxu0
        %v2206 = vadd.f32 %v324, %v2205
        %2207 = vmatmul.f32.gmra.mxu0 %v2120
        %v2208 = vpop.f32.mrf.mxu0
        %v2209 = vadd.f32 %v325, %v2208
        %2210 = vmatmul.f32.gmra.mxu0 %v2122
        %v2211 = vpop.f32.mrf.mxu0
        %v2212 = vadd.f32 %v326, %v2211
        %2213 = vmatmul.f32.gmra.mxu0 %v2124
        %v2214 = vpop.f32.mrf.mxu0
        %v2215 = vadd.f32 %v327, %v2214
        %2216 = vmatmul.f32.gmra.mxu0 %v2126
        %v2217 = vpop.f32.mrf.mxu0
        %v2218 = vadd.f32 %v328, %v2217
        %2219 = vmatmul.f32.gmra.mxu0 %v2128
        %v2220 = vpop.f32.mrf.mxu0
        %v2221 = vadd.f32 %v329, %v2220
        %2222 = vmatmul.f32.gmra.mxu0 %v2130
        %v2223 = vpop.f32.mrf.mxu0
        %v2224 = vadd.f32 %v330, %v2223
        %2225 = vmatmul.f32.gmra.mxu0 %v2132
        %v2226 = vpop.f32.mrf.mxu0
        %v2227 = vadd.f32 %v331, %v2226
        %2228 = vmatmul.f32.gmra.mxu0 %v2134
        %v2229 = vpop.f32.mrf.mxu0
        %v2230 = vadd.f32 %v332, %v2229
        %2231 = vmatmul.f32.gmra.mxu0 %v2136
        %v2232 = vpop.f32.mrf.mxu0
        %v2233 = vadd.f32 %v333, %v2232
        %2234 = vdwg.mxu0
        %2235 = vmax.xlane.f32.xlu0 %v2188
        %v2236 = vpop.xlane.xlu0 %2235
        %2237 = vmax.xlane.f32.xlu0 %v2191
        %v2238 = vpop.xlane.xlu0 %2237
        %2239 = vmax.xlane.f32.xlu0 %v2194
        %v2240 = vpop.xlane.xlu0 %2239
        %2241 = vmax.xlane.f32.xlu0 %v2197
        %v2242 = vpop.xlane.xlu0 %2241
        %2243 = vmax.xlane.f32.xlu0 %v2200
        %v2244 = vpop.xlane.xlu0 %2243
        %2245 = vmax.xlane.f32.xlu0 %v2203
        %v2246 = vpop.xlane.xlu0 %2245
        %2247 = vmax.xlane.f32.xlu0 %v2206
        %v2248 = vpop.xlane.xlu0 %2247
        %2249 = vmax.xlane.f32.xlu0 %v2209
        %v2250 = vpop.xlane.xlu0 %2249
        %2251 = vmax.xlane.f32.xlu0 %v2212
        %v2252 = vpop.xlane.xlu0 %2251
        %2253 = vmax.xlane.f32.xlu0 %v2215
        %v2254 = vpop.xlane.xlu0 %2253
        %2255 = vmax.xlane.f32.xlu0 %v2218
        %v2256 = vpop.xlane.xlu0 %2255
        %2257 = vmax.xlane.f32.xlu0 %v2221
        %v2258 = vpop.xlane.xlu0 %2257
        %2259 = vmax.xlane.f32.xlu0 %v2224
        %v2260 = vpop.xlane.xlu0 %2259
        %2261 = vmax.xlane.f32.xlu0 %v2227
        %v2262 = vpop.xlane.xlu0 %2261
        %2263 = vmax.xlane.f32.xlu0 %v2230
        %v2264 = vpop.xlane.xlu0 %2263
        %2265 = vmax.xlane.f32.xlu0 %v2233
        %v2266 = vpop.xlane.xlu0 %2265
        %v2267 = vsub.f32 %v2188, %v2236
        %v2268 = vsub.f32 %v2191, %v2238
        %v2269 = vsub.f32 %v2194, %v2240
        %v2270 = vsub.f32 %v2197, %v2242
        %v2271 = vsub.f32 %v2200, %v2244
        %v2272 = vsub.f32 %v2203, %v2246
        %v2273 = vsub.f32 %v2206, %v2248
        %v2274 = vsub.f32 %v2209, %v2250
        %v2275 = vsub.f32 %v2212, %v2252
        %v2276 = vsub.f32 %v2215, %v2254
        %v2277 = vsub.f32 %v2218, %v2256
        %v2278 = vsub.f32 %v2221, %v2258
        %v2279 = vsub.f32 %v2224, %v2260
        %v2280 = vsub.f32 %v2227, %v2262
        %v2281 = vsub.f32 %v2230, %v2264
        %v2282 = vsub.f32 %v2233, %v2266
        %v2283 = vmul.f32 %v2267, 1.442695
        %v2284 = vpow.pop %v2283
        %v2285 = vmul.f32 %v2268, 1.442695
        %v2286 = vpow.pop %v2285
        %v2287 = vmul.f32 %v2269, 1.442695
        %v2288 = vpow.pop %v2287
        %v2289 = vmul.f32 %v2270, 1.442695
        %v2290 = vpow.pop %v2289
        %v2291 = vmul.f32 %v2271, 1.442695
        %v2292 = vpow.pop %v2291
        %v2293 = vmul.f32 %v2272, 1.442695
        %v2294 = vpow.pop %v2293
        %v2295 = vmul.f32 %v2273, 1.442695
        %v2296 = vpow.pop %v2295
        %v2297 = vmul.f32 %v2274, 1.442695
        %v2298 = vpow.pop %v2297
        %v2299 = vmul.f32 %v2275, 1.442695
        %v2300 = vpow.pop %v2299
        %v2301 = vmul.f32 %v2276, 1.442695
        %v2302 = vpow.pop %v2301
        %v2303 = vmul.f32 %v2277, 1.442695
        %v2304 = vpow.pop %v2303
        %v2305 = vmul.f32 %v2278, 1.442695
        %v2306 = vpow.pop %v2305
        %v2307 = vmul.f32 %v2279, 1.442695
        %v2308 = vpow.pop %v2307
        %v2309 = vmul.f32 %v2280, 1.442695
        %v2310 = vpow.pop %v2309
        %v2311 = vmul.f32 %v2281, 1.442695
        %v2312 = vpow.pop %v2311
        %v2313 = vmul.f32 %v2282, 1.442695
        %v2314 = vpow.pop %v2313
        %2315 = vadd.xlane.f32.xlu0 %v2284
        %v2316 = vpop.xlane.xlu0 %2315
        %2317 = vadd.xlane.f32.xlu0 %v2286
        %v2318 = vpop.xlane.xlu0 %2317
        %2319 = vadd.xlane.f32.xlu0 %v2288
        %v2320 = vpop.xlane.xlu0 %2319
        %2321 = vadd.xlane.f32.xlu0 %v2290
        %v2322 = vpop.xlane.xlu0 %2321
        %2323 = vadd.xlane.f32.xlu0 %v2292
        %v2324 = vpop.xlane.xlu0 %2323
        %2325 = vadd.xlane.f32.xlu0 %v2294
        %v2326 = vpop.xlane.xlu0 %2325
        %2327 = vadd.xlane.f32.xlu0 %v2296
        %v2328 = vpop.xlane.xlu0 %2327
        %2329 = vadd.xlane.f32.xlu0 %v2298
        %v2330 = vpop.xlane.xlu0 %2329
        %2331 = vadd.xlane.f32.xlu0 %v2300
        %v2332 = vpop.xlane.xlu0 %2331
        %2333 = vadd.xlane.f32.xlu0 %v2302
        %v2334 = vpop.xlane.xlu0 %2333
        %2335 = vadd.xlane.f32.xlu0 %v2304
        %v2336 = vpop.xlane.xlu0 %2335
        %2337 = vadd.xlane.f32.xlu0 %v2306
        %v2338 = vpop.xlane.xlu0 %2337
        %2339 = vadd.xlane.f32.xlu0 %v2308
        %v2340 = vpop.xlane.xlu0 %2339
        %2341 = vadd.xlane.f32.xlu0 %v2310
        %v2342 = vpop.xlane.xlu0 %2341
        %2343 = vadd.xlane.f32.xlu0 %v2312
        %v2344 = vpop.xlane.xlu0 %2343
        %2345 = vadd.xlane.f32.xlu0 %v2314
        %v2346 = vpop.xlane.xlu0 %2345
        %2347 = vrot.lane.b32.xlu0 %v530, 32
        %v2348 = vpop.permute.xlu0 %2347
        %2349 = vrot.lane.b32.xlu0 %v533, 32
        %v2350 = vpop.permute.xlu0 %2349
        %2351 = vrot.lane.b32.xlu0 %v536, 32
        %v2352 = vpop.permute.xlu0 %2351
        %2353 = vrot.lane.b32.xlu0 %v539, 32
        %v2354 = vpop.permute.xlu0 %2353
        %2355 = vrot.lane.b32.xlu0 %v542, 32
        %v2356 = vpop.permute.xlu0 %2355
        %2357 = vrot.lane.b32.xlu0 %v545, 32
        %v2358 = vpop.permute.xlu0 %2357
        %2359 = vrot.lane.b32.xlu0 %v548, 32
        %v2360 = vpop.permute.xlu0 %2359
        %2361 = vrot.lane.b32.xlu0 %v551, 32
        %v2362 = vpop.permute.xlu0 %2361
        %2363 = vrot.lane.b32.xlu0 %v554, 32
        %v2364 = vpop.permute.xlu0 %2363
        %2365 = vrot.lane.b32.xlu0 %v557, 32
        %v2366 = vpop.permute.xlu0 %2365
        %2367 = vrot.lane.b32.xlu0 %v560, 32
        %v2368 = vpop.permute.xlu0 %2367
        %2369 = vrot.lane.b32.xlu0 %v563, 32
        %v2370 = vpop.permute.xlu0 %2369
        %2371 = vrot.lane.b32.xlu0 %v566, 32
        %v2372 = vpop.permute.xlu0 %2371
        %2373 = vrot.lane.b32.xlu0 %v569, 32
        %v2374 = vpop.permute.xlu0 %2373
        %2375 = vrot.lane.b32.xlu0 %v572, 32
        %v2376 = vpop.permute.xlu0 %2375
        %2377 = vrot.lane.b32.xlu0 %v575, 32
        %v2378 = vpop.permute.xlu0 %2377
        %2395 = vmatpush.msra.mxu0 %v2378
        %2396 = vmatpush.msra.mxu0 %v2376
        %2397 = vmatpush.msra.mxu0 %v2374
        %2398 = vmatpush.msra.mxu0 %v2372
        %2399 = vmatpush.msra.mxu0 %v2370
        %2400 = vmatpush.msra.mxu0 %v2368
        %2401 = vmatpush.msra.mxu0 %v2366
        %2402 = vmatpush.msra.mxu0 %v2364
        %2403 = vmatpush.msra.mxu0 %v2362
        %2404 = vmatpush.msra.mxu0 %v2360
        %2405 = vmatpush.msra.mxu0 %v2358
        %2406 = vmatpush.msra.mxu0 %v2356
        %2407 = vmatpush.msra.mxu0 %v2354
        %2408 = vmatpush.msra.mxu0 %v2352
        %2409 = vmatpush.msra.mxu0 %v2350
        %2410 = vmatpush.msra.mxu0 %v2348
        %2411 = vmatmul.f32.gmra.mxu0 %v2284
        %v2412 = vpop.f32.mrf.mxu0
        %v2413 = vadd.f32 0.0, %v2412
        %2414 = vmatmul.f32.gmra.mxu0 %v2286
        %v2415 = vpop.f32.mrf.mxu0
        %v2416 = vadd.f32 0.0, %v2415
        %2417 = vmatmul.f32.gmra.mxu0 %v2288
        %v2418 = vpop.f32.mrf.mxu0
        %v2419 = vadd.f32 0.0, %v2418
        %2420 = vmatmul.f32.gmra.mxu0 %v2290
        %v2421 = vpop.f32.mrf.mxu0
        %v2422 = vadd.f32 0.0, %v2421
        %2423 = vmatmul.f32.gmra.mxu0 %v2292
        %v2424 = vpop.f32.mrf.mxu0
        %v2425 = vadd.f32 0.0, %v2424
        %2426 = vmatmul.f32.gmra.mxu0 %v2294
        %v2427 = vpop.f32.mrf.mxu0
        %v2428 = vadd.f32 0.0, %v2427
        %2429 = vmatmul.f32.gmra.mxu0 %v2296
        %v2430 = vpop.f32.mrf.mxu0
        %v2431 = vadd.f32 0.0, %v2430
        %2432 = vmatmul.f32.gmra.mxu0 %v2298
        %v2433 = vpop.f32.mrf.mxu0
        %v2434 = vadd.f32 0.0, %v2433
        %2435 = vmatmul.f32.gmra.mxu0 %v2300
        %v2436 = vpop.f32.mrf.mxu0
        %v2437 = vadd.f32 0.0, %v2436
        %2438 = vmatmul.f32.gmra.mxu0 %v2302
        %v2439 = vpop.f32.mrf.mxu0
        %v2440 = vadd.f32 0.0, %v2439
        %2441 = vmatmul.f32.gmra.mxu0 %v2304
        %v2442 = vpop.f32.mrf.mxu0
        %v2443 = vadd.f32 0.0, %v2442
        %2444 = vmatmul.f32.gmra.mxu0 %v2306
        %v2445 = vpop.f32.mrf.mxu0
        %v2446 = vadd.f32 0.0, %v2445
        %2447 = vmatmul.f32.gmra.mxu0 %v2308
        %v2448 = vpop.f32.mrf.mxu0
        %v2449 = vadd.f32 0.0, %v2448
        %2450 = vmatmul.f32.gmra.mxu0 %v2310
        %v2451 = vpop.f32.mrf.mxu0
        %v2452 = vadd.f32 0.0, %v2451
        %2453 = vmatmul.f32.gmra.mxu0 %v2312
        %v2454 = vpop.f32.mrf.mxu0
        %v2455 = vadd.f32 0.0, %v2454
        %2456 = vmatmul.f32.gmra.mxu0 %v2314
        %v2457 = vpop.f32.mrf.mxu0
        %v2458 = vadd.f32 0.0, %v2457
        %2459 = vdwg.mxu0
        %v2460 = vrcp.pop %v2316
        %v2461 = vrcp.pop %v2318
        %v2462 = vrcp.pop %v2320
        %v2463 = vrcp.pop %v2322
        %v2464 = vrcp.pop %v2324
        %v2465 = vrcp.pop %v2326
        %v2466 = vrcp.pop %v2328
        %v2467 = vrcp.pop %v2330
        %v2468 = vrcp.pop %v2332
        %v2469 = vrcp.pop %v2334
        %v2470 = vrcp.pop %v2336
        %v2471 = vrcp.pop %v2338
        %v2472 = vrcp.pop %v2340
        %v2473 = vrcp.pop %v2342
        %v2474 = vrcp.pop %v2344
        %v2475 = vrcp.pop %v2346
        %v2476 = vmul.f32 %v2413, %v2460
        %v2477 = vmul.f32 %v2416, %v2461
        %v2478 = vmul.f32 %v2419, %v2462
        %v2479 = vmul.f32 %v2422, %v2463
        %v2480 = vmul.f32 %v2425, %v2464
        %v2481 = vmul.f32 %v2428, %v2465
        %v2482 = vmul.f32 %v2431, %v2466
        %v2483 = vmul.f32 %v2434, %v2467
        %v2484 = vmul.f32 %v2437, %v2468
        %v2485 = vmul.f32 %v2440, %v2469
        %v2486 = vmul.f32 %v2443, %v2470
        %v2487 = vmul.f32 %v2446, %v2471
        %v2488 = vmul.f32 %v2449, %v2472
        %v2489 = vmul.f32 %v2452, %v2473
        %v2490 = vmul.f32 %v2455, %v2474
        %v2491 = vmul.f32 %v2458, %v2475
        %2508 = vrot.lane.b32.xlu0 %v2476, 96
        %v2509 = vpop.permute.xlu0 %2508
        %2510 = vrot.lane.b32.xlu0 %v2477, 96
        %v2511 = vpop.permute.xlu0 %2510
        %2512 = vrot.lane.b32.xlu0 %v2478, 96
        %v2513 = vpop.permute.xlu0 %2512
        %2514 = vrot.lane.b32.xlu0 %v2479, 96
        %v2515 = vpop.permute.xlu0 %2514
        %2516 = vrot.lane.b32.xlu0 %v2480, 96
        %v2517 = vpop.permute.xlu0 %2516
        %2518 = vrot.lane.b32.xlu0 %v2481, 96
        %v2519 = vpop.permute.xlu0 %2518
        %2520 = vrot.lane.b32.xlu0 %v2482, 96
        %v2521 = vpop.permute.xlu0 %2520
        %2522 = vrot.lane.b32.xlu0 %v2483, 96
        %v2523 = vpop.permute.xlu0 %2522
        %2524 = vrot.lane.b32.xlu0 %v2484, 96
        %v2525 = vpop.permute.xlu0 %2524
        %2526 = vrot.lane.b32.xlu0 %v2485, 96
        %v2527 = vpop.permute.xlu0 %2526
        %2528 = vrot.lane.b32.xlu0 %v2486, 96
        %v2529 = vpop.permute.xlu0 %2528
        %2530 = vrot.lane.b32.xlu0 %v2487, 96
        %v2531 = vpop.permute.xlu0 %2530
        %2532 = vrot.lane.b32.xlu0 %v2488, 96
        %v2533 = vpop.permute.xlu0 %2532
        %2534 = vrot.lane.b32.xlu0 %v2489, 96
        %v2535 = vpop.permute.xlu0 %2534
        %2536 = vrot.lane.b32.xlu0 %v2490, 96
        %v2537 = vpop.permute.xlu0 %2536
        %2538 = vrot.lane.b32.xlu0 %v2491, 96
        %v2539 = vpop.permute.xlu0 %2538
        %vm2556 = vcmask 1048320
        %2557 = vst.msk [vmem:[#allocation2] sm:$0xff] %vm2556, %v2509
        %2558 = vst.msk [vmem:[#allocation2 + $0x8] sm:$0xff] %vm2556, %v2511
        %2559 = vst.msk [vmem:[#allocation2 + $0x10] sm:$0xff] %vm2556, %v2513
        %2560 = vst.msk [vmem:[#allocation2 + $0x18] sm:$0xff] %vm2556, %v2515
        %2561 = vst.msk [vmem:[#allocation2 + $0x20] sm:$0xff] %vm2556, %v2517
        %2562 = vst.msk [vmem:[#allocation2 + $0x28] sm:$0xff] %vm2556, %v2519
        %2563 = vst.msk [vmem:[#allocation2 + $0x30] sm:$0xff] %vm2556, %v2521
        %2564 = vst.msk [vmem:[#allocation2 + $0x38] sm:$0xff] %vm2556, %v2523
        %2565 = vst.msk [vmem:[#allocation2 + $0x40] sm:$0xff] %vm2556, %v2525
        %2566 = vst.msk [vmem:[#allocation2 + $0x48] sm:$0xff] %vm2556, %v2527
        %2567 = vst.msk [vmem:[#allocation2 + $0x50] sm:$0xff] %vm2556, %v2529
        %2568 = vst.msk [vmem:[#allocation2 + $0x58] sm:$0xff] %vm2556, %v2531
        %2569 = vst.msk [vmem:[#allocation2 + $0x60] sm:$0xff] %vm2556, %v2533
        %2570 = vst.msk [vmem:[#allocation2 + $0x68] sm:$0xff] %vm2556, %v2535
        %2571 = vst.msk [vmem:[#allocation2 + $0x70] sm:$0xff] %vm2556, %v2537
        %2572 = vst.msk [vmem:[#allocation2 + $0x78] sm:$0xff] %vm2556, %v2539
        %v2573 = vld [vmem:[#allocation2] sm:$0xff]
        %v2574 = vld [vmem:[#allocation2 + $0x8] sm:$0xff]
        %v2575 = vld [vmem:[#allocation2 + $0x10] sm:$0xff]
        %v2576 = vld [vmem:[#allocation2 + $0x18] sm:$0xff]
        %v2577 = vld [vmem:[#allocation2 + $0x20] sm:$0xff]
        %v2578 = vld [vmem:[#allocation2 + $0x28] sm:$0xff]
        %v2579 = vld [vmem:[#allocation2 + $0x30] sm:$0xff]
        %v2580 = vld [vmem:[#allocation2 + $0x38] sm:$0xff]
        %v2581 = vld [vmem:[#allocation2 + $0x40] sm:$0xff]
        %v2582 = vld [vmem:[#allocation2 + $0x48] sm:$0xff]
        %v2583 = vld [vmem:[#allocation2 + $0x50] sm:$0xff]
        %v2584 = vld [vmem:[#allocation2 + $0x58] sm:$0xff]
        %v2585 = vld [vmem:[#allocation2 + $0x60] sm:$0xff]
        %v2586 = vld [vmem:[#allocation2 + $0x68] sm:$0xff]
        %v2587 = vld [vmem:[#allocation2 + $0x70] sm:$0xff]
        %v2588 = vld [vmem:[#allocation2 + $0x78] sm:$0xff]
        %v2589 = vld [vmem:[%s5] sm:$0xff]
        %v2590 = vld [vmem:[%s5 + $0x8] sm:$0xff]
        %v2591 = vld [vmem:[%s5 + $0x10] sm:$0xff]
        %v2592 = vld [vmem:[%s5 + $0x18] sm:$0xff]
        %v2593 = vld [vmem:[%s5 + $0x20] sm:$0xff]
        %v2594 = vld [vmem:[%s5 + $0x28] sm:$0xff]
        %v2595 = vld [vmem:[%s5 + $0x30] sm:$0xff]
        %v2596 = vld [vmem:[%s5 + $0x38] sm:$0xff]
        %v2597 = vld [vmem:[%s5 + $0x40] sm:$0xff]
        %v2598 = vld [vmem:[%s5 + $0x48] sm:$0xff]
        %v2599 = vld [vmem:[%s5 + $0x50] sm:$0xff]
        %v2600 = vld [vmem:[%s5 + $0x58] sm:$0xff]
        %v2601 = vld [vmem:[%s5 + $0x60] sm:$0xff]
        %v2602 = vld [vmem:[%s5 + $0x68] sm:$0xff]
        %v2603 = vld [vmem:[%s5 + $0x70] sm:$0xff]
        %v2604 = vld [vmem:[%s5 + $0x78] sm:$0xff]
        %2605 = vmatpush.msra.mxu0 %v2604
        %2606 = vmatpush.msra.mxu0 %v2603
        %2607 = vmatpush.msra.mxu0 %v2602
        %2608 = vmatpush.msra.mxu0 %v2601
        %2609 = vmatpush.msra.mxu0 %v2600
        %2610 = vmatpush.msra.mxu0 %v2599
        %2611 = vmatpush.msra.mxu0 %v2598
        %2612 = vmatpush.msra.mxu0 %v2597
        %2613 = vmatpush.msra.mxu0 %v2596
        %2614 = vmatpush.msra.mxu0 %v2595
        %2615 = vmatpush.msra.mxu0 %v2594
        %2616 = vmatpush.msra.mxu0 %v2593
        %2617 = vmatpush.msra.mxu0 %v2592
        %2618 = vmatpush.msra.mxu0 %v2591
        %2619 = vmatpush.msra.mxu0 %v2590
        %2620 = vmatpush.msra.mxu0 %v2589
        %2621 = vmatmul.f32.gmra.mxu0 %v2573
        %v2622 = vpop.f32.mrf.mxu0
        %v2623 = vadd.f32 %v270, %v2622
        %2624 = vmatmul.f32.gmra.mxu0 %v2574
        %v2625 = vpop.f32.mrf.mxu0
        %v2626 = vadd.f32 %v271, %v2625
        %2627 = vmatmul.f32.gmra.mxu0 %v2575
        %v2628 = vpop.f32.mrf.mxu0
        %v2629 = vadd.f32 %v272, %v2628
        %2630 = vmatmul.f32.gmra.mxu0 %v2576
        %v2631 = vpop.f32.mrf.mxu0
        %v2632 = vadd.f32 %v273, %v2631
        %2633 = vmatmul.f32.gmra.mxu0 %v2577
        %v2634 = vpop.f32.mrf.mxu0
        %v2635 = vadd.f32 %v274, %v2634
        %2636 = vmatmul.f32.gmra.mxu0 %v2578
        %v2637 = vpop.f32.mrf.mxu0
        %v2638 = vadd.f32 %v275, %v2637
        %2639 = vmatmul.f32.gmra.mxu0 %v2579
        %v2640 = vpop.f32.mrf.mxu0
        %v2641 = vadd.f32 %v276, %v2640
        %2642 = vmatmul.f32.gmra.mxu0 %v2580
        %v2643 = vpop.f32.mrf.mxu0
        %v2644 = vadd.f32 %v277, %v2643
        %2645 = vmatmul.f32.gmra.mxu0 %v2581
        %v2646 = vpop.f32.mrf.mxu0
        %v2647 = vadd.f32 %v278, %v2646
        %2648 = vmatmul.f32.gmra.mxu0 %v2582
        %v2649 = vpop.f32.mrf.mxu0
        %v2650 = vadd.f32 %v279, %v2649
        %2651 = vmatmul.f32.gmra.mxu0 %v2583
        %v2652 = vpop.f32.mrf.mxu0
        %v2653 = vadd.f32 %v280, %v2652
        %2654 = vmatmul.f32.gmra.mxu0 %v2584
        %v2655 = vpop.f32.mrf.mxu0
        %v2656 = vadd.f32 %v281, %v2655
        %2657 = vmatmul.f32.gmra.mxu0 %v2585
        %v2658 = vpop.f32.mrf.mxu0
        %v2659 = vadd.f32 %v282, %v2658
        %2660 = vmatmul.f32.gmra.mxu0 %v2586
        %v2661 = vpop.f32.mrf.mxu0
        %v2662 = vadd.f32 %v283, %v2661
        %2663 = vmatmul.f32.gmra.mxu0 %v2587
        %v2664 = vpop.f32.mrf.mxu0
        %v2665 = vadd.f32 %v284, %v2664
        %2666 = vmatmul.f32.gmra.mxu0 %v2588
        %v2667 = vpop.f32.mrf.mxu0
        %v2668 = vadd.f32 %v285, %v2667
        %2669 = vdwg.mxu0
        %v2670 = vadd.f32 %v2623, %v2626
        %v2671 = vadd.f32 %v2670, %v2629
        %v2672 = vadd.f32 %v2671, %v2632
        %v2673 = vadd.f32 %v2672, %v2635
        %v2674 = vadd.f32 %v2673, %v2638
        %v2675 = vadd.f32 %v2674, %v2641
        %v2676 = vadd.f32 %v2675, %v2644
        %v2677 = vadd.f32 %v2676, %v2647
        %v2678 = vadd.f32 %v2677, %v2650
        %v2679 = vadd.f32 %v2678, %v2653
        %v2680 = vadd.f32 %v2679, %v2656
        %v2681 = vadd.f32 %v2680, %v2659
        %v2682 = vadd.f32 %v2681, %v2662
        %v2683 = vadd.f32 %v2682, %v2665
        %v2684 = vadd.f32 %v2683, %v2668
        %2685 = vadd.xlane.f32.xlu0 %v2684
        %v2686 = vpop.xlane.xlu0 %2685
        %v2687 = vrot.slane %v2686, 4
        %v2688 = vadd.f32 %v2686, %v2687
        %v2689 = vrot.slane %v2688, 2
        %v2690 = vadd.f32 %v2688, %v2689
        %v2691 = vrot.slane %v2690, 1
        %v2692 = vadd.f32 %v2690, %v2691
        %s2693 = vtos %v2692
        %v2694 = vrcp.pop 16384.0
        %v2695 = vmul.f32 16384.0, %v2694
        %v2696 = vsub.f32 1.0, %v2695
        %v2697 = vmul.f32 %v2694, %v2696
        %v2698 = vadd.f32 %v2694, %v2697
        %vm2699 = vweird.f32 %v2694
        %v2700 = vsel %vm2699, %v2694, %v2698
        %s2701 = vtos %v2700
        %s2702 = smul.f32 %s2693, %s2701
        %v2703 = vstv %s2702
        %v2704 = vsub.f32 %v2623, %v2703
        %v2705 = vsub.f32 %v2626, %v2703
        %v2706 = vsub.f32 %v2629, %v2703
        %v2707 = vsub.f32 %v2632, %v2703
        %v2708 = vsub.f32 %v2635, %v2703
        %v2709 = vsub.f32 %v2638, %v2703
        %v2710 = vsub.f32 %v2641, %v2703
        %v2711 = vsub.f32 %v2644, %v2703
        %v2712 = vsub.f32 %v2647, %v2703
        %v2713 = vsub.f32 %v2650, %v2703
        %v2714 = vsub.f32 %v2653, %v2703
        %v2715 = vsub.f32 %v2656, %v2703
        %v2716 = vsub.f32 %v2659, %v2703
        %v2717 = vsub.f32 %v2662, %v2703
        %v2718 = vsub.f32 %v2665, %v2703
        %v2719 = vsub.f32 %v2668, %v2703
        %v2720 = vmul.f32 %v2704, %v2704
        %v2721 = vmul.f32 %v2705, %v2705
        %v2722 = vmul.f32 %v2706, %v2706
        %v2723 = vmul.f32 %v2707, %v2707
        %v2724 = vmul.f32 %v2708, %v2708
        %v2725 = vmul.f32 %v2709, %v2709
        %v2726 = vmul.f32 %v2710, %v2710
        %v2727 = vmul.f32 %v2711, %v2711
        %v2728 = vmul.f32 %v2712, %v2712
        %v2729 = vmul.f32 %v2713, %v2713
        %v2730 = vmul.f32 %v2714, %v2714
        %v2731 = vmul.f32 %v2715, %v2715
        %v2732 = vmul.f32 %v2716, %v2716
        %v2733 = vmul.f32 %v2717, %v2717
        %v2734 = vmul.f32 %v2718, %v2718
        %v2735 = vmul.f32 %v2719, %v2719
        %v2736 = vadd.f32 %v2720, %v2721
        %v2737 = vadd.f32 %v2736, %v2722
        %v2738 = vadd.f32 %v2737, %v2723
        %v2739 = vadd.f32 %v2738, %v2724
        %v2740 = vadd.f32 %v2739, %v2725
        %v2741 = vadd.f32 %v2740, %v2726
        %v2742 = vadd.f32 %v2741, %v2727
        %v2743 = vadd.f32 %v2742, %v2728
        %v2744 = vadd.f32 %v2743, %v2729
        %v2745 = vadd.f32 %v2744, %v2730
        %v2746 = vadd.f32 %v2745, %v2731
        %v2747 = vadd.f32 %v2746, %v2732
        %v2748 = vadd.f32 %v2747, %v2733
        %v2749 = vadd.f32 %v2748, %v2734
        %v2750 = vadd.f32 %v2749, %v2735
        %2751 = vadd.xlane.f32.xlu0 %v2750
        %v2752 = vpop.xlane.xlu0 %2751
        %v2753 = vrot.slane %v2752, 4
        %v2754 = vadd.f32 %v2752, %v2753
        %v2755 = vrot.slane %v2754, 2
        %v2756 = vadd.f32 %v2754, %v2755
        %v2757 = vrot.slane %v2756, 1
        %v2758 = vadd.f32 %v2756, %v2757
        %s2759 = vtos %v2758
        %v2760 = vrcp.pop 16384.0
        %v2761 = vmul.f32 16384.0, %v2760
        %v2762 = vsub.f32 1.0, %v2761
        %v2763 = vmul.f32 %v2760, %v2762
        %v2764 = vadd.f32 %v2760, %v2763
        %vm2765 = vweird.f32 %v2760
        %v2766 = vsel %vm2765, %v2760, %v2764
        %s2767 = vtos %v2766
        %s2768 = smul.f32 %s2759, %s2767
        %s2769 = sadd.f32 %s2768, 1e-05
        %v2770 = vstv %s2769
        %v2771 = vrsqrt.pop %v2770
        %v2772 = vmul.f32 %v2771, %v2770
        %v2773 = vmul.f32 %v2772, %v2771
        %v2774 = vmul.f32 0.5, %v2773
        %v2775 = vsub.f32 1.5, %v2774
        %v2776 = vmul.f32 %v2771, %v2775
        %vm2777 = vweird.f32 %v2770
        %vm2778 = vweird.f32 %v2771
        %vm2779 = vmor %vm2777, %vm2778
        %v2780 = vsel %vm2779, %v2771, %v2776
        %s2781 = vtos %v2780
        %v2782 = vstv %s2781
        %v2783 = vmul.f32 %v2704, %v2782
        %v2784 = vmul.f32 %v2705, %v2782
        %v2785 = vmul.f32 %v2706, %v2782
        %v2786 = vmul.f32 %v2707, %v2782
        %v2787 = vmul.f32 %v2708, %v2782
        %v2788 = vmul.f32 %v2709, %v2782
        %v2789 = vmul.f32 %v2710, %v2782
        %v2790 = vmul.f32 %v2711, %v2782
        %v2791 = vmul.f32 %v2712, %v2782
        %v2792 = vmul.f32 %v2713, %v2782
        %v2793 = vmul.f32 %v2714, %v2782
        %v2794 = vmul.f32 %v2715, %v2782
        %v2795 = vmul.f32 %v2716, %v2782
        %v2796 = vmul.f32 %v2717, %v2782
        %v2797 = vmul.f32 %v2718, %v2782
        %v2798 = vmul.f32 %v2719, %v2782
        %2799 = vst [vmem:[%s259] sm:$0xff] %v2783
        %2800 = vst [vmem:[%s259 + $0x8] sm:$0xff] %v2784
        %2801 = vst [vmem:[%s259 + $0x10] sm:$0xff] %v2785
        %2802 = vst [vmem:[%s259 + $0x18] sm:$0xff] %v2786
        %2803 = vst [vmem:[%s259 + $0x20] sm:$0xff] %v2787
        %2804 = vst [vmem:[%s259 + $0x28] sm:$0xff] %v2788
        %2805 = vst [vmem:[%s259 + $0x30] sm:$0xff] %v2789
        %2806 = vst [vmem:[%s259 + $0x38] sm:$0xff] %v2790
        %2807 = vst [vmem:[%s259 + $0x40] sm:$0xff] %v2791
        %2808 = vst [vmem:[%s259 + $0x48] sm:$0xff] %v2792
        %2809 = vst [vmem:[%s259 + $0x50] sm:$0xff] %v2793
        %2810 = vst [vmem:[%s259 + $0x58] sm:$0xff] %v2794
        %2811 = vst [vmem:[%s259 + $0x60] sm:$0xff] %v2795
        %2812 = vst [vmem:[%s259 + $0x68] sm:$0xff] %v2796
        %2813 = vst [vmem:[%s259 + $0x70] sm:$0xff] %v2797
        %2814 = vst [vmem:[%s259 + $0x78] sm:$0xff] %v2798
        %s2815 = sand.u32 %s164, 1
        %s2816 = scalar_lea.sflag [#allocation4], %s2815
        %s2817 = sand.u32 %s164, 1
        %s2818 = smul.addr %s2817, 128
        %s2819 = scalar_lea.vmem [#allocation3], %s2818
        // Predicated region
        $region45: #{multi_head_attention.1} parent=43 // pred_check
          %p2820 = pneg %p174
        $region46: #{multi_head_attention.1} parent=43 // pred_check_branch
          %2822 = sbr.rel (%p2820) target = $region48
        $region47: #{multi_head_attention.1} parent=43 // pred_region
          %2824 = vsyncadd %s2816, 0
          %s2825 = smul.addr %s20, 16
          %s2826 = smul.addr %s2825, 8
          %s2827 = scalar_lea.hbm %s6, %s2826
          %s2828 = sshll.u32 %s2819, 4
          %s2829 = int_to_ptr.vmem [resolvable:$true] %s2828
          %s2830 = sshll.u32 %s2827, 4
          %s2831 = int_to_ptr.hbm [resolvable:$true] %s2830
          %2836 = dma.vmem_to_hbm [thread:$0]  %s2829, 2048, %s2831, %s2816, 128, 128, 8
        $region48: #{multi_head_attention.1} parent=43 // pred_fallthru
          _
      $region44: #{multi_head_attention.1} parent=5 // pred_fallthru
        _
      %p2837 = scmp.le.s32.totalorder 2, %s15
      // Predicated region
      $region49: #{multi_head_attention.1} parent=5 // pred_check
        %p2838 = pneg %p2837
      $region50: #{multi_head_attention.1} parent=5 // pred_check_branch
        %2840 = sbr.rel (%p2838) target = $region52
      $region51: #{multi_head_attention.1} parent=5 // pred_region
        %s2841 = ssub.s32 %s15, 2
        // Predicated region
        $region53: #{multi_head_attention.1} parent=51 // pred_check
          %p2842 = pneg %p180
        $region54: #{multi_head_attention.1} parent=51 // pred_check_branch
          %2844 = sbr.rel (%p2842) target = $region56
        $region55: #{multi_head_attention.1} parent=51 // pred_region
          %s2845 = sand.u32 %s165, 1
          %s2846 = scalar_lea.sflag [#allocation4], %s2845
          %s2847 = sand.u32 %s165, 1
          %s2848 = smul.addr %s2847, 128
          %s2849 = scalar_lea.vmem [#allocation3], %s2848
          %2851 = dma.done %s2846, 2048
        $region56: #{multi_head_attention.1} parent=51 // pred_fallthru
          _
      $region52: #{multi_head_attention.1} parent=5 // pred_fallthru
        _
    $region6: #{multi_head_attention.1} parent=1 // loop_footer
      %s19 = sadd.s32 1, %s15
    $region7: #{multi_head_attention.1} parent=1 // loop_footer_branch
      %14 = sbr.rel target = $region3
    $region8: #{multi_head_attention.1} parent=1 // loop_exit
      _
    %2852 = vsyncpa [#allocation4], 1
    %s2853 = scalar_lea.sflag [#allocation4], 1
    %2854 = vsyncpa %s2853, 1

</llo_original>
